<compile_context>
chip_gen: v7x
topology: tpu7x:2x2x1
jax: 0.10.0
libtpu: 0.0.40
codegen_flags: <defaults>
</compile_context>

<pallas_src>
import jax
import jax.numpy as jnp
from jax import lax
from jax.experimental import pallas as pl
from jax.experimental.pallas import tpu as pltpu


def _round_up(x, m):
    return ((x + m - 1) // m) * m


def _vmem_limit_bytes():
    # Raise the scoped-VMEM limit above the conservative default, leaving headroom:
    # ~96 MiB on v5e/v6e (128 MiB physical), ~48 MiB on v7x (64 MiB physical).
    try:
        cap = pltpu.get_tpu_info().vmem_capacity_bytes
    except Exception:
        cap = 64 << 20
    return int(min(cap * 3 // 4, 96 << 20))


def _pick_tiles(B, S_pad, D_pad, esz, budget_bytes):
    """Pick (batch block Bt, output-column tile Tj) that fit the VMEM budget."""

    def need(bt, tj):
        x_blk = 2 * bt * S_pad * D_pad * esz        # double-buffered x block
        out_blk = 2 * bt * S_pad * tj * 4           # double-buffered f32 output block
        bsym_blk = D_pad * D_pad * esz              # single-buffered constant B
        y_scr = bt * S_pad * D_pad * esz            # persistent y scratch
        q_scr = bt * S_pad * 128 * 4                # q scratch (lane-padded)
        trans = bt * S_pad * (D_pad + tj) * 4       # in-flight f32 temporaries
        return x_blk + out_blk + bsym_blk + y_scr + q_scr + trans

    # Column tile: largest multiple of 128 dividing S_pad, capped at 512.
    tj = 128
    for cand in (512, 384, 256, 128):
        if cand <= S_pad and S_pad % cand == 0:
            tj = cand
            break
    while tj > 128 and need(1, tj) > budget_bytes:
        tj = max(c for c in range(128, tj, 128) if S_pad % c == 0)

    # Batch block: as large as fits (<= 8) and divides B; keep >= 2 grid steps when
    # B >= 2 so the "parallel" batch axis can still split across v7x's two TensorCores.
    bt_cap = B if B < 2 else max(1, B // 2)
    bt = 1
    for cand in range(min(8, bt_cap), 0, -1):
        if B % cand == 0 and need(cand, tj) <= budget_bytes:
            bt = cand
            break
    return bt, tj


def _nonpsd_probe_kernel(x_ref, bsym_ref, out_ref, y_ref, q_ref):
    # x_ref:    (Bt, S, D)  compute dtype - one batch block, full (padded) sequence
    # bsym_ref: (D, D)      compute dtype - B = A + A^T (constant across the grid)
    # out_ref:  (Bt, S, Tj) f32           - column tile j of the pairwise scores
    # y_ref:    (Bt, S, D)  compute dtype - scratch: x @ B (rebuilt when j == 0)
    # q_ref:    (Bt, S, 1)  f32           - scratch: 0.5 * x_i^T B x_i
    jj = pl.program_id(1)
    bt, s, d = x_ref.shape
    tj = out_ref.shape[-1]

    @pl.when(jj == 0)
    def _build_row_terms():
        x = x_ref[...]
        x2 = x.reshape(bt * s, d)
        # MXU: bf16 x bf16 -> f32 accumulation (2-D matmul, canonical MXU path).
        y2 = jnp.dot(x2, bsym_ref[...], preferred_element_type=jnp.float32)
        y = y2.reshape(bt, s, d)
        q_ref[...] = 0.5 * jnp.sum(y * x.astype(jnp.float32), axis=-1, keepdims=True)
        y_ref[...] = y.astype(y_ref.dtype)

    col0 = pl.multiple_of(jj * tj, 128)
    x_j = x_ref[:, pl.ds(col0, tj), :]                            # (Bt, Tj, D)
    # cross[b, i, j] = y[b, i, :] . x[b, j, :]  -- NT-form: contraction stays on the
    # lane dim of both operands, no x^T materialization.
    cross = lax.dot_general(
        y_ref[...], x_j,
        dimension_numbers=(((2,), (2,)), ((0,), (0,))),
        preferred_element_type=jnp.float32)                       # (Bt, S, Tj)
    q_col = q_ref[...]                                            # (Bt, S, 1)
    q_row = jnp.swapaxes(q_ref[:, pl.ds(col0, tj), :], 1, 2)      # (Bt, 1, Tj)
    out_ref[...] = (q_col + q_row) - cross


def _probe_pallas_call(x, bsym, *, bt, tj, compute_dtype, vmem_limit, single_buffer_bsym):
    B, S_pad, D_pad = x.shape
    esz = jnp.dtype(compute_dtype).itemsize
    grid = (B // bt, S_pad // tj)

    bsym_kwargs = {"pipeline_mode": pl.Buffered(1)} if single_buffer_bsym else {}

    flops = (2 * B * S_pad * D_pad * D_pad + 2 * B * S_pad * S_pad * D_pad
             + 4 * B * S_pad * S_pad)
    bytes_accessed = esz * (B * S_pad * D_pad + D_pad * D_pad) + 4 * B * S_pad * S_pad
    cost = pl.CostEstimate(flops=flops, transcendentals=0, bytes_accessed=bytes_accessed)

    return pl.pallas_call(
        _nonpsd_probe_kernel,
        out_shape=jax.ShapeDtypeStruct((B, S_pad, S_pad), jnp.float32),
        grid_spec=pltpu.PrefetchScalarGridSpec(
            num_scalar_prefetch=0,
            grid=grid,
            in_specs=[
                pl.BlockSpec((bt, S_pad, D_pad), lambda b, j: (b, 0, 0)),
                pl.BlockSpec((D_pad, D_pad), lambda b, j: (0, 0), **bsym_kwargs),
            ],
            out_specs=pl.BlockSpec((bt, S_pad, tj), lambda b, j: (b, 0, j)),
            scratch_shapes=[
                pltpu.VMEM((bt, S_pad, D_pad), compute_dtype),    # y = x @ B
                pltpu.VMEM((bt, S_pad, 1), jnp.float32),          # 0.5 * q
            ],
        ),
        # Batch axis is embarrassingly parallel (megacore-shardable); the column-tile
        # axis reuses the per-batch y/q scratch -> "arbitrary".
        # TODO(synk): confirm with an xprof trace that v7x splits the batch axis across
        # both TensorCores; if not, switch to an explicit core_map / CORE_PARALLEL split.
        compiler_params=pltpu.CompilerParams(
            dimension_semantics=("parallel", "arbitrary"),
            vmem_limit_bytes=vmem_limit,
        ),
        cost_estimate=cost,
    )(x, bsym)


def two_word_nonpsd_probe(batch, proj, *, compute_dtype=jnp.bfloat16):
    """batch: [B, S, D]; proj: [D, D] (the nn.Parameter A). Returns [B, S, S] float32."""
    B, S, D = batch.shape
    assert proj.shape == (D, D)

    # Symmetrize the bilinear form once in f32, then cast operands to the MXU dtype.
    proj_f32 = proj.astype(jnp.float32)
    bsym = (proj_f32 + proj_f32.T).astype(compute_dtype)
    x = batch.astype(compute_dtype)

    # Pad S and D to multiples of 128: lane-dense loads / unmasked stores and MXU-friendly
    # contraction dims. Zero padding does not perturb the un-padded scores (sliced off below).
    S_pad, D_pad = _round_up(S, 128), _round_up(D, 128)
    if (S_pad, D_pad) != (S, D):
        x = jnp.pad(x, ((0, 0), (0, S_pad - S), (0, D_pad - D)))
        bsym = jnp.pad(bsym, ((0, D_pad - D), (0, D_pad - D)))

    vmem_limit = _vmem_limit_bytes()
    esz = jnp.dtype(compute_dtype).itemsize
    bt, tj = _pick_tiles(B, S_pad, D_pad, esz, int(vmem_limit * 0.6))

    kwargs = dict(bt=bt, tj=tj, compute_dtype=compute_dtype, vmem_limit=vmem_limit)
    try:
        out = _probe_pallas_call(x, bsym, single_buffer_bsym=True, **kwargs)
    except Exception:
        # Fallback if this JAX/Mosaic build rejects pl.Buffered(1) single-buffering.
        out = _probe_pallas_call(x, bsym, single_buffer_bsym=False, **kwargs)

    # TODO(synk): for S beyond ~2-3k on v7x (64 MiB VMEM) also tile the output rows (i)
    # and stream y row-tiles instead of keeping the full (S, D) y scratch resident.
    return out[:, :S, :S]


def _reference(batch, proj):
    """Pure-JAX transcription of the PyTorch TwoWordNonPSDProbe.forward."""
    B, S, D = batch.shape
    bs = jnp.broadcast_to(batch[:, :, None, :], (B, S, S, D))      # batch_square
    diffs = bs - jnp.swapaxes(bs, 1, 2)                            # x_i - x_j
    transformed = jnp.einsum('bijd,de->bije', diffs, proj)         # diffs @ A
    return jnp.sum(transformed * diffs, axis=-1)                   # (diffs @ A) . diffs


if __name__ == "__main__":
    # Small shapes consistent with the module: hidden_dim=32, max_seq_len=8, batch=2.
    B, S, D = 2, 8, 32

    key = jax.random.PRNGKey(0)
    kx, kp = jax.random.split(key)
    batch = jax.random.normal(kx, (B, S, D), dtype=jnp.float32)
    # nn.init.uniform_(self.proj, -0.05, 0.05)
    proj = jax.random.uniform(kp, (D, D), jnp.float32, -0.05, 0.05)

    ref = _reference(batch, proj)

    # Fast path: bf16 MXU operands, f32 accumulation (tolerance scaled for bf16 inputs).
    out = jax.block_until_ready(two_word_nonpsd_probe(batch, proj))
    assert out.shape == (B, S, S)
    scale = float(jnp.max(jnp.abs(ref)))
    err = float(jnp.max(jnp.abs(out - ref)))
    assert err <= 3e-2 * scale + 1e-2, f"bf16 path mismatch: err={err:.3e} scale={scale:.3e}"

    # Exactness of the reformulation itself: f32 operand path matches at tight tolerance.
    out_f32 = jax.block_until_ready(
        two_word_nonpsd_probe(batch, proj, compute_dtype=jnp.float32))
    assert jnp.allclose(out_f32, ref, atol=1e-3, rtol=1e-3), "f32 path mismatch vs reference"

    print("KERNEL_OK")
</pallas_src>

<mosaic_0001>
module attributes {stable_mosaic.version = 11 : i64} {
  func.func @_nonpsd_probe_kernel(%arg0: i32, %arg1: i32, %arg2: memref<1x128x128xbf16, #tpu.memory_space<vmem>>, %arg3: memref<128x128xbf16, #tpu.memory_space<vmem>>, %arg4: memref<1x128x128xf32, #tpu.memory_space<vmem>>, %arg5: memref<1x128x128xbf16, #tpu.memory_space<vmem>>, %arg6: memref<1x128x1xf32, #tpu.memory_space<vmem>>) attributes {dimension_semantics = [#tpu.dimension_semantics<parallel>, #tpu.dimension_semantics<arbitrary>], iteration_bounds = array<i64: 2, 1>, scalar_prefetch = 0 : i64, scratch_operands = 2 : i64, tpu.core_type = #tpu.core_type<tc>, window_params = [{transform_indices = @transform_0, window_bounds = array<i64: 1, 128, 128>}, {pipeline_mode = #tpu.pipeline_mode<synchronous>, transform_indices = @transform_1, window_bounds = array<i64: 128, 128>}, {transform_indices = @transform_2, window_bounds = array<i64: 1, 128, 128>}]} {
    %c0_i32 = arith.constant 0 : i32
    %0 = arith.cmpi eq, %arg1, %c0_i32 : i32
    %1 = arith.extui %0 : i1 to i32
    %c0_i32_0 = arith.constant 0 : i32
    %2 = arith.cmpi ne, %1, %c0_i32_0 : i32
    scf.if %2 {
      %c0_13 = arith.constant 0 : index
      %c0_14 = arith.constant 0 : index
      %c0_15 = arith.constant 0 : index
      %18 = vector.load %arg2[%c0_13, %c0_14, %c0_15] : memref<1x128x128xbf16, #tpu.memory_space<vmem>>, vector<1x128x128xbf16>
      %19 = vector.shape_cast %18 : vector<1x128x128xbf16> to vector<128x128xbf16>
      %c0_16 = arith.constant 0 : index
      %c0_17 = arith.constant 0 : index
      %20 = vector.load %arg3[%c0_16, %c0_17] : memref<128x128xbf16, #tpu.memory_space<vmem>>, vector<128x128xbf16>
      %cst_18 = arith.constant dense<0.000000e+00> : vector<128x128xf32>
      %21 = tpu.matmul %19, %20, %cst_18 {dimension_numbers = #tpu.dot_dimension_numbers<[1], [0], [0], [1], [0, 0, 1, 1], [], []>} : vector<128x128xbf16>, vector<128x128xbf16>, vector<128x128xf32> -> vector<128x128xf32>
      %22 = vector.shape_cast %21 : vector<128x128xf32> to vector<1x128x128xf32>
      %23 = arith.extf %18 : vector<1x128x128xbf16> to vector<1x128x128xf32>
      %24 = arith.mulf %22, %23 : vector<1x128x128xf32>
      %cst_19 = arith.constant dense<0.000000e+00> : vector<1x128xf32>
      %25 = vector.multi_reduction <add>, %24, %cst_19 [2] : vector<1x128x128xf32> to vector<1x128xf32>
      %26 = vector.shape_cast %25 : vector<1x128xf32> to vector<1x128x1xf32>
      %cst_20 = arith.constant 5.000000e-01 : f32
      %27 = vector.broadcast %cst_20 : f32 to vector<1x128x1xf32>
      %28 = arith.mulf %27, %26 : vector<1x128x1xf32>
      %c0_21 = arith.constant 0 : index
      %c0_22 = arith.constant 0 : index
      %c0_23 = arith.constant 0 : index
      %29 = vector.load %arg6[%c0_21, %c0_22, %c0_23] : memref<1x128x1xf32, #tpu.memory_space<vmem>>, vector<1x128x1xf32>
      tpu.vector_store %arg6[%c0_21, %c0_22, %c0_23], %28 {strides = array<i32>} : memref<1x128x1xf32, #tpu.memory_space<vmem>>, vector<1x128x1xf32>,
      %30 = arith.truncf %22 : vector<1x128x128xf32> to vector<1x128x128xbf16>
      %c0_24 = arith.constant 0 : index
      %c0_25 = arith.constant 0 : index
      %c0_26 = arith.constant 0 : index
      %31 = vector.load %arg5[%c0_24, %c0_25, %c0_26] : memref<1x128x128xbf16, #tpu.memory_space<vmem>>, vector<1x128x128xbf16>
      tpu.vector_store %arg5[%c0_24, %c0_25, %c0_26], %30 {strides = array<i32>} : memref<1x128x128xbf16, #tpu.memory_space<vmem>>, vector<1x128x128xbf16>,
    } else {
    }
    %c128_i32 = arith.constant 128 : i32
    %3 = arith.muli %arg1, %c128_i32 : i32
    %4 = tpu.assume_multiple %3, 128 : i32
    %c0 = arith.constant 0 : index
    %5 = arith.index_cast %4 : i32 to index
    %c0_1 = arith.constant 0 : index
    %6 = vector.load %arg2[%c0, %5, %c0_1] : memref<1x128x128xbf16, #tpu.memory_space<vmem>>, vector<1x128x128xbf16>
    %c0_2 = arith.constant 0 : index
    %c0_3 = arith.constant 0 : index
    %c0_4 = arith.constant 0 : index
    %7 = vector.load %arg5[%c0_2, %c0_3, %c0_4] : memref<1x128x128xbf16, #tpu.memory_space<vmem>>, vector<1x128x128xbf16>
    %cst = arith.constant dense<0.000000e+00> : vector<1x128x128xf32>
    %8 = tpu.matmul %7, %6, %cst {dimension_numbers = #tpu.dot_dimension_numbers<[2], [2], [1], [1], [0, 0, 0, 1, 1, 1], [0], [0]>} : vector<1x128x128xbf16>, vector<1x128x128xbf16>, vector<1x128x128xf32> -> vector<1x128x128xf32>
    %c0_5 = arith.constant 0 : index
    %c0_6 = arith.constant 0 : index
    %c0_7 = arith.constant 0 : index
    %9 = vector.load %arg6[%c0_5, %c0_6, %c0_7] : memref<1x128x1xf32, #tpu.memory_space<vmem>>, vector<1x128x1xf32>
    %c0_8 = arith.constant 0 : index
    %10 = arith.index_cast %4 : i32 to index
    %c0_9 = arith.constant 0 : index
    %11 = vector.load %arg6[%c0_8, %10, %c0_9] : memref<1x128x1xf32, #tpu.memory_space<vmem>>, vector<1x128x1xf32>
    %12 = tpu.transpose %11, [0, 2, 1] : vector<1x128x1xf32> -> vector<1x1x128xf32>
    %13 = vector.broadcast %9 : vector<1x128x1xf32> to vector<1x128x128xf32>
    %14 = vector.broadcast %12 : vector<1x1x128xf32> to vector<1x128x128xf32>
    %15 = arith.addf %13, %14 : vector<1x128x128xf32>
    %16 = arith.subf %15, %8 : vector<1x128x128xf32>
    %c0_10 = arith.constant 0 : index
    %c0_11 = arith.constant 0 : index
    %c0_12 = arith.constant 0 : index
    %17 = vector.load %arg4[%c0_10, %c0_11, %c0_12] : memref<1x128x128xf32, #tpu.memory_space<vmem>>, vector<1x128x128xf32>
    tpu.vector_store %arg4[%c0_10, %c0_11, %c0_12], %16 {strides = array<i32>} : memref<1x128x128xf32, #tpu.memory_space<vmem>>, vector<1x128x128xf32>,
    return
  }
  func.func @transform_0(%arg0: i32, %arg1: i32) -> (i32, i32, i32) {
    %c0_i32 = arith.constant 0 : i32
    %c0_i32_0 = arith.constant 0 : i32
    %c0_i32_1 = arith.constant 0 : i32
    return %arg0, %c0_i32, %c0_i32_0 : i32, i32, i32
  }
  func.func @transform_1(%arg0: i32, %arg1: i32) -> (i32, i32) {
    %c0_i32 = arith.constant 0 : i32
    %c0_i32_0 = arith.constant 0 : i32
    %c0_i32_1 = arith.constant 0 : i32
    return %c0_i32, %c0_i32_0 : i32, i32
  }
  func.func @transform_2(%arg0: i32, %arg1: i32) -> (i32, i32, i32) {
    %c0_i32 = arith.constant 0 : i32
    %c0_i32_0 = arith.constant 0 : i32
    return %arg0, %c0_i32, %arg1 : i32, i32, i32
  }
}

module attributes {stable_mosaic.version = 11 : i64} {
  func.func @_nonpsd_probe_kernel(%arg0: i32, %arg1: i32, %arg2: memref<1x128x128xbf16, #tpu.memory_space<vmem>>, %arg3: memref<128x128xbf16, #tpu.memory_space<vmem>>, %arg4: memref<1x128x128xf32, #tpu.memory_space<vmem>>, %arg5: memref<1x128x128xbf16, #tpu.memory_space<vmem>>, %arg6: memref<1x128x1xf32, #tpu.memory_space<vmem>>) attributes {dimension_semantics = [#tpu.dimension_semantics<parallel>, #tpu.dimension_semantics<arbitrary>], iteration_bounds = array<i64: 2, 1>, scalar_prefetch = 0 : i64, scratch_operands = 2 : i64, tpu.core_type = #tpu.core_type<tc>, window_params = [{transform_indices = @transform_0, window_bounds = array<i64: 1, 128, 128>}, {pipeline_mode = #tpu.pipeline_mode<synchronous>, transform_indices = @transform_1, window_bounds = array<i64: 128, 128>}, {transform_indices = @transform_2, window_bounds = array<i64: 1, 128, 128>}]} {
    %c0_i32 = arith.constant 0 : i32
    %0 = arith.cmpi eq, %arg1, %c0_i32 : i32
    %1 = arith.extui %0 : i1 to i32
    %c0_i32_0 = arith.constant 0 : i32
    %2 = arith.cmpi ne, %1, %c0_i32_0 : i32
    scf.if %2 {
      %c0_13 = arith.constant 0 : index
      %c0_14 = arith.constant 0 : index
      %c0_15 = arith.constant 0 : index
      %18 = vector.load %arg2[%c0_13, %c0_14, %c0_15] : memref<1x128x128xbf16, #tpu.memory_space<vmem>>, vector<1x128x128xbf16>
      %19 = vector.shape_cast %18 : vector<1x128x128xbf16> to vector<128x128xbf16>
      %c0_16 = arith.constant 0 : index
      %c0_17 = arith.constant 0 : index
      %20 = vector.load %arg3[%c0_16, %c0_17] : memref<128x128xbf16, #tpu.memory_space<vmem>>, vector<128x128xbf16>
      %cst_18 = arith.constant dense<0.000000e+00> : vector<128x128xf32>
      %21 = tpu.matmul %19, %20, %cst_18 {dimension_numbers = #tpu.dot_dimension_numbers<[1], [0], [0], [1], [0, 0, 1, 1], [], []>} : vector<128x128xbf16>, vector<128x128xbf16>, vector<128x128xf32> -> vector<128x128xf32>
      %22 = vector.shape_cast %21 : vector<128x128xf32> to vector<1x128x128xf32>
      %23 = arith.extf %18 : vector<1x128x128xbf16> to vector<1x128x128xf32>
      %24 = arith.mulf %22, %23 : vector<1x128x128xf32>
      %cst_19 = arith.constant dense<0.000000e+00> : vector<1x128xf32>
      %25 = vector.multi_reduction <add>, %24, %cst_19 [2] : vector<1x128x128xf32> to vector<1x128xf32>
      %26 = vector.shape_cast %25 : vector<1x128xf32> to vector<1x128x1xf32>
      %cst_20 = arith.constant 5.000000e-01 : f32
      %27 = vector.broadcast %cst_20 : f32 to vector<1x128x1xf32>
      %28 = arith.mulf %27, %26 : vector<1x128x1xf32>
      %c0_21 = arith.constant 0 : index
      %c0_22 = arith.constant 0 : index
      %c0_23 = arith.constant 0 : index
      %29 = vector.load %arg6[%c0_21, %c0_22, %c0_23] : memref<1x128x1xf32, #tpu.memory_space<vmem>>, vector<1x128x1xf32>
      tpu.vector_store %arg6[%c0_21, %c0_22, %c0_23], %28 {strides = array<i32>} : memref<1x128x1xf32, #tpu.memory_space<vmem>>, vector<1x128x1xf32>,
      %30 = arith.truncf %22 : vector<1x128x128xf32> to vector<1x128x128xbf16>
      %c0_24 = arith.constant 0 : index
      %c0_25 = arith.constant 0 : index
      %c0_26 = arith.constant 0 : index
      %31 = vector.load %arg5[%c0_24, %c0_25, %c0_26] : memref<1x128x128xbf16, #tpu.memory_space<vmem>>, vector<1x128x128xbf16>
      tpu.vector_store %arg5[%c0_24, %c0_25, %c0_26], %30 {strides = array<i32>} : memref<1x128x128xbf16, #tpu.memory_space<vmem>>, vector<1x128x128xbf16>,
    } else {
    }
    %c128_i32 = arith.constant 128 : i32
    %3 = arith.muli %arg1, %c128_i32 : i32
    %4 = tpu.assume_multiple %3, 128 : i32
    %c0 = arith.constant 0 : index
    %5 = arith.index_cast %4 : i32 to index
    %c0_1 = arith.constant 0 : index
    %6 = vector.load %arg2[%c0, %5, %c0_1] : memref<1x128x128xbf16, #tpu.memory_space<vmem>>, vector<1x128x128xbf16>
    %c0_2 = arith.constant 0 : index
    %c0_3 = arith.constant 0 : index
    %c0_4 = arith.constant 0 : index
    %7 = vector.load %arg5[%c0_2, %c0_3, %c0_4] : memref<1x128x128xbf16, #tpu.memory_space<vmem>>, vector<1x128x128xbf16>
    %cst = arith.constant dense<0.000000e+00> : vector<1x128x128xf32>
    %8 = tpu.matmul %7, %6, %cst {dimension_numbers = #tpu.dot_dimension_numbers<[2], [2], [1], [1], [0, 0, 0, 1, 1, 1], [0], [0]>} : vector<1x128x128xbf16>, vector<1x128x128xbf16>, vector<1x128x128xf32> -> vector<1x128x128xf32>
    %c0_5 = arith.constant 0 : index
    %c0_6 = arith.constant 0 : index
    %c0_7 = arith.constant 0 : index
    %9 = vector.load %arg6[%c0_5, %c0_6, %c0_7] : memref<1x128x1xf32, #tpu.memory_space<vmem>>, vector<1x128x1xf32>
    %c0_8 = arith.constant 0 : index
    %10 = arith.index_cast %4 : i32 to index
    %c0_9 = arith.constant 0 : index
    %11 = vector.load %arg6[%c0_8, %10, %c0_9] : memref<1x128x1xf32, #tpu.memory_space<vmem>>, vector<1x128x1xf32>
    %12 = tpu.transpose %11, [0, 2, 1] : vector<1x128x1xf32> -> vector<1x1x128xf32>
    %13 = vector.broadcast %9 : vector<1x128x1xf32> to vector<1x128x128xf32>
    %14 = vector.broadcast %12 : vector<1x1x128xf32> to vector<1x128x128xf32>
    %15 = arith.addf %13, %14 : vector<1x128x128xf32>
    %16 = arith.subf %15, %8 : vector<1x128x128xf32>
    %c0_10 = arith.constant 0 : index
    %c0_11 = arith.constant 0 : index
    %c0_12 = arith.constant 0 : index
    %17 = vector.load %arg4[%c0_10, %c0_11, %c0_12] : memref<1x128x128xf32, #tpu.memory_space<vmem>>, vector<1x128x128xf32>
    tpu.vector_store %arg4[%c0_10, %c0_11, %c0_12], %16 {strides = array<i32>} : memref<1x128x128xf32, #tpu.memory_space<vmem>>, vector<1x128x128xf32>,
    return
  }
  func.func @transform_0(%arg0: i32, %arg1: i32) -> (i32, i32, i32) {
    %c0_i32 = arith.constant 0 : i32
    %c0_i32_0 = arith.constant 0 : i32
    %c0_i32_1 = arith.constant 0 : i32
    return %arg0, %c0_i32, %c0_i32_0 : i32, i32, i32
  }
  func.func @transform_1(%arg0: i32, %arg1: i32) -> (i32, i32) {
    %c0_i32 = arith.constant 0 : i32
    %c0_i32_0 = arith.constant 0 : i32
    %c0_i32_1 = arith.constant 0 : i32
    return %c0_i32, %c0_i32_0 : i32, i32
  }
  func.func @transform_2(%arg0: i32, %arg1: i32) -> (i32, i32, i32) {
    %c0_i32 = arith.constant 0 : i32
    %c0_i32_0 = arith.constant 0 : i32
    return %arg0, %c0_i32, %arg1 : i32, i32, i32
  }
}

</mosaic_0001>

<llo_original>
// kernel: tpu_custom_call.1
$region0: #{tpu_custom_call.1}
  #allocation0 [shape = 'u32[]', space=smem, size = 0x4, offset = 0x4, fixed_abs, tag = 'smem constant byte address 0x4 - core index']
  #allocation1 [shape = 'u32[144,128]{1,0:T(1,128)}', space=vmem, size = 0x12000, scoped, tag = 'internal scratch']
  #allocation2 [shape = 'bf16[1,128,128]{2,1,0:T(16,128)(2,1)}', space=vmem, size = 0x8000, scoped, tag = 'scratch operand']
  #allocation3 [shape = 'f32[1,128,1]{2,1,0:T(8,128)}', space=vmem, size = 0x10000, scoped, tag = 'scratch operand']
  %s0 = inlined_call_operand.hbm [shape: bf16[2,128,128], index: 0, kind: input, shape index: {}]
  %s1 = inlined_call_operand.hbm [shape: bf16[128,128], index: 1, kind: input, shape index: {}]
  %s2 = inlined_call_operand.hbm [shape: f32[2,128,128], index: 2, kind: output, shape index: {}]
  %s3 = sld [smem:[#allocation0]]
  $region53: #{tpu_custom_call.1} parent=0
    _
  %s5 = ssub.s32 1, %s3
  %s6 = scalar_select 0, %s5, %s3
  $region1: #{tpu_custom_call.1} parent=0
    #allocation4 [shape = 'u8[65536]{0}', space=vmem, size = 0x10000, scoped, tag = 'input window, operand 0']
    #allocation5 [shape = 's32[2]{0}', space=sflag, size = 0x8, scoped, tag = 'scoped memory for tpu_custom_call.1']
    #allocation6 [shape = 's32[2]{0}', space=sflag, size = 0x8, scoped, tag = 'scoped memory for tpu_custom_call.1']
    #allocation7 [shape = 'u8[32768]{0}', space=vmem, size = 0x8000, scoped, tag = 'input window, operand 1, single buffered']
    #allocation8 [shape = 's32[1]{0}', space=sflag, size = 0x4, scoped, tag = 'scoped memory for tpu_custom_call.1']
    #allocation9 [shape = 'u8[131072]{0}', space=vmem, size = 0x20000, scoped, tag = 'output window, operand 0']
    %7 = vsyncpa [#allocation5], 0
    %s8 = scalar_lea.sflag [#allocation5], 1
    %9 = vsyncpa %s8, 0
    %10 = vsyncpa [#allocation8], 0
    %11 = vsyncpa [#allocation6], 0
    %s12 = scalar_lea.sflag [#allocation6], 1
    %13 = vsyncpa %s12, 0
    loop: start=0, step=1, limit=4
    $region2: #{tpu_custom_call.1} parent=1 // loop_pre_header
      _
    $region3: #{tpu_custom_call.1} parent=1 // loop_header
      %s15 = sphi 0, %s19
      %p16 = scmp.ge.s32.totalorder %s15, 4
      %s22 = sphi 0, %s34
      %s23 = sphi 0, %s30
      %s24 = sphi 0, %s22
      %s25 = sphi 0, %s23
      %s26 = sphi 0, %s24
      %s27 = sphi 0, %s25
      %s37 = sphi 0, %s39
      %s40 = sphi 0, %s37
      %s41 = sphi 0, %s40
      %s57 = sphi 0, %s41
      %s61 = sphi 0, %s61
      %s63 = sphi 0, %s61
      %s64 = sphi 0, %s63
      %s78 = sphi 0, %s64
      %s86 = sphi 0, %s88
      %s89 = sphi 0, %s86
      %s90 = sphi 0, %s89
      %s106 = sphi 0, %s90
    $region4: #{tpu_custom_call.1} parent=1 // loop_header_branch
      %18 = sbr.rel (%p16) target = $region8
    $region5: #{tpu_custom_call.1} parent=1 // loop_body
      %s20 = ssub.s32 %s15, 1
      %s21 = ssub.s32 %s15, 2
      %s28 = sadd.s32 1, %s23
      %p29 = scmp.ge.s32.totalorder %s28, 1
      %s30 = scalar_select %p29, 0, %s28
      %s31 = sadd.s32 1, %s22
      %s32 = scalar_select %p29, %s31, %s22
      %p33 = scmp.ge.s32.totalorder %s32, 2
      %s34 = scalar_select %p33, 0, %s32
      %s35 = ssub.s32 %s22, %s34
      %p36 = scmp.eq.s32.totalorder %s35, 0
      %s38 = sadd.s32 %s37, 1
      %s39 = scalar_select %p36, %s37, %s38
      %p42 = pneg %p36
      %p43 = scmp.eq.s32.totalorder %s15, 1
      %p44 = por %p42, %p43
      %p45 = scmp.ne.s32.totalorder %s37, %s40
      %p46 = scmp.eq.s32.totalorder %s15, 0
      %p47 = por %p45, %p46
      %p48 = scmp.ne.s32.totalorder %s37, %s40
      %p49 = scmp.eq.s32.totalorder %s20, 1
      %p50 = por %p48, %p49
      %p51 = scmp.ne.s32.totalorder %s40, %s41
      %p52 = scmp.eq.s32.totalorder %s20, 0
      %p53 = por %p51, %p52
      %p54 = scmp.ne.s32.totalorder %s40, %s41
      %p55 = scmp.eq.s32.totalorder %s21, 1
      %p56 = por %p54, %p55
      %p58 = scmp.ne.s32.totalorder %s41, %s57
      %p59 = scmp.eq.s32.totalorder %s21, 0
      %p60 = por %p58, %p59
      %s62 = sadd.s32 %s61, 1
      %p65 = scmp.eq.s32.totalorder %s15, 1
      %p66 = scmp.ne.s32.totalorder %s61, %s63
      %p67 = scmp.eq.s32.totalorder %s15, 0
      %p68 = por %p66, %p67
      %p69 = scmp.ne.s32.totalorder %s61, %s63
      %p70 = scmp.eq.s32.totalorder %s20, 1
      %p71 = por %p69, %p70
      %p72 = scmp.ne.s32.totalorder %s63, %s64
      %p73 = scmp.eq.s32.totalorder %s20, 0
      %p74 = por %p72, %p73
      %p75 = scmp.ne.s32.totalorder %s63, %s64
      %p76 = scmp.eq.s32.totalorder %s21, 1
      %p77 = por %p75, %p76
      %p79 = scmp.ne.s32.totalorder %s64, %s78
      %p80 = scmp.eq.s32.totalorder %s21, 0
      %p81 = por %p79, %p80
      %s82 = ssub.s32 %s22, %s34
      %s83 = ssub.s32 %s23, %s30
      %s84 = sor.u32 %s82, %s83
      %p85 = scmp.eq.s32.totalorder %s84, 0
      %s87 = sadd.s32 %s86, 1
      %s88 = scalar_select %p85, %s86, %s87
      %p91 = pneg %p85
      %p92 = scmp.eq.s32.totalorder %s15, 1
      %p93 = por %p91, %p92
      %p94 = scmp.ne.s32.totalorder %s86, %s89
      %p95 = scmp.eq.s32.totalorder %s15, 0
      %p96 = por %p94, %p95
      %p97 = scmp.ne.s32.totalorder %s86, %s89
      %p98 = scmp.eq.s32.totalorder %s20, 1
      %p99 = por %p97, %p98
      %p100 = scmp.ne.s32.totalorder %s89, %s90
      %p101 = scmp.eq.s32.totalorder %s20, 0
      %p102 = por %p100, %p101
      %p103 = scmp.ne.s32.totalorder %s89, %s90
      %p104 = scmp.eq.s32.totalorder %s21, 1
      %p105 = por %p103, %p104
      %p107 = scmp.ne.s32.totalorder %s90, %s106
      %p108 = scmp.eq.s32.totalorder %s21, 0
      %p109 = por %p107, %p108
      %p110 = scmp.le.s32.totalorder 1, %s15
      %p111 = scmp.lt.s32.totalorder %s15, 3
      %p112 = pnand %p110, %p111
      %p113 = pneg %p112
      // Predicated region
      $region9: #{tpu_custom_call.1} parent=5 // pred_check
        _
      $region10: #{tpu_custom_call.1} parent=5 // pred_check_branch
        %115 = sbr.rel (%p112) target = $region12
      $region11: #{tpu_custom_call.1} parent=5 // pred_region
        %s116 = ssub.s32 %s15, 1
        // Predicated region
        $region13: #{tpu_custom_call.1} parent=11 // pred_check
          %p117 = pneg %p74
        $region14: #{tpu_custom_call.1} parent=11 // pred_check_branch
          %119 = sbr.rel (%p117) target = $region16
        $region15: #{tpu_custom_call.1} parent=11 // pred_region
          %s121 = ssub.s32 1024, 1024
          %122 = vsyncadd [#allocation8], %s121
          %s123 = sshll.u32 [#allocation7], 4
          %s124 = int_to_ptr.vmem [resolvable:$true] %s123
          %129 = dma.hbm_to_vmem [thread:$0]  %s1, 1024, %s124, [#allocation8], 64, 64, 4
        $region16: #{tpu_custom_call.1} parent=11 // pred_fallthru
          _
      $region12: #{tpu_custom_call.1} parent=5 // pred_fallthru
        _
      %p130 = scmp.lt.s32.totalorder %s15, 2
      // Predicated region
      $region17: #{tpu_custom_call.1} parent=5 // pred_check
        %p131 = pneg %p130
      $region18: #{tpu_custom_call.1} parent=5 // pred_check_branch
        %133 = sbr.rel (%p131) target = $region20
      $region19: #{tpu_custom_call.1} parent=5 // pred_region
        // Predicated region
        $region21: #{tpu_custom_call.1} parent=19 // pred_check
          %p134 = pneg %p47
        $region22: #{tpu_custom_call.1} parent=19 // pred_check_branch
          %136 = sbr.rel (%p134) target = $region24
        $region23: #{tpu_custom_call.1} parent=19 // pred_region
          %s137 = sand.u32 %s37, 1
          %s138 = scalar_lea.sflag [#allocation5], %s137
          %s139 = sand.u32 %s37, 1
          %s140 = smul.addr %s139, 64
          %s141 = scalar_lea.vmem [#allocation4], %s140
          %s143 = ssub.s32 1024, 1024
          %144 = vsyncadd %s138, %s143
          %s145 = smul.addr %s22, 16
          %s146 = smul.addr %s145, 64
          %s147 = scalar_lea.hbm %s0, %s146
          %s148 = sshll.u32 %s141, 4
          %s149 = int_to_ptr.vmem [resolvable:$true] %s148
          %154 = dma.hbm_to_vmem [thread:$0]  %s147, 1024, %s149, %s138, 64, 64, 4
        $region24: #{tpu_custom_call.1} parent=19 // pred_fallthru
          _
      $region20: #{tpu_custom_call.1} parent=5 // pred_fallthru
        _
      %p155 = scmp.le.s32.totalorder 1, %s15
      %p156 = scmp.lt.s32.totalorder %s15, 3
      %p157 = pnand %p155, %p156
      %p158 = pneg %p157
      // Predicated region
      $region25: #{tpu_custom_call.1} parent=5 // pred_check
        _
      $region26: #{tpu_custom_call.1} parent=5 // pred_check_branch
        %160 = sbr.rel (%p157) target = $region28
      $region27: #{tpu_custom_call.1} parent=5 // pred_region
        %s161 = ssub.s32 %s15, 1
        %s162 = sand.u32 %s40, 1
        %s163 = scalar_lea.sflag [#allocation5], %s162
        %s164 = sand.u32 %s40, 1
        %s165 = smul.addr %s164, 64
        %s166 = scalar_lea.vmem [#allocation4], %s165
        // Predicated region
        $region29: #{tpu_custom_call.1} parent=27 // pred_check
          %p167 = pneg %p53
        $region30: #{tpu_custom_call.1} parent=27 // pred_check_branch
          %169 = sbr.rel (%p167) target = $region32
        $region31: #{tpu_custom_call.1} parent=27 // pred_region
          %170 = dma.done %s163, 1024
        $region32: #{tpu_custom_call.1} parent=27 // pred_fallthru
          _
        // Predicated region
        $region33: #{tpu_custom_call.1} parent=27 // pred_check
          %p171 = pneg %p74
        $region34: #{tpu_custom_call.1} parent=27 // pred_check_branch
          %173 = sbr.rel (%p171) target = $region36
        $region35: #{tpu_custom_call.1} parent=27 // pred_region
          %174 = dma.done [#allocation8], 1024
        $region36: #{tpu_custom_call.1} parent=27 // pred_fallthru
          _
        %s175 = sand.u32 %s40, 1
        %s176 = scalar_lea.sflag [#allocation5], %s175
        %s177 = sand.u32 %s40, 1
        %s178 = smul.addr %s177, 64
        %s179 = scalar_lea.vmem [#allocation4], %s178
        %p180 = pneg %p53
        %p181 = pneg %p50
        %p182 = pneg %p74
        %p183 = pneg %p71
        %p184 = pneg %p102
        %p185 = pneg %p99
        %s186 = sand.u32 %s89, 1
        %s187 = scalar_lea.sflag [#allocation6], %s186
        %s188 = sand.u32 %s89, 1
        %s189 = smul.addr %s188, 128
        %s190 = scalar_lea.vmem [#allocation9], %s189
        %p192 = scmp.eq.s32.totalorder %s25, 0
        // Predicated region
        $region37: #{tpu_custom_call.1} parent=27 // pred_check
          %p193 = pneg %p192
        $region38: #{tpu_custom_call.1} parent=27 // pred_check_branch
          %195 = sbr.rel (%p193) target = $region40
        $region39: #{tpu_custom_call.1} parent=27 // pred_region
          %v196 = vld [vmem:[%s166] sm:$0xf]
          %v197 = vld [vmem:[%s166 + $0x4] sm:$0xf]
          %v198 = vld [vmem:[%s166 + $0x8] sm:$0xf]
          %v199 = vld [vmem:[%s166 + $0xc] sm:$0xf]
          %v200 = vld [vmem:[%s166 + $0x10] sm:$0xf]
          %v201 = vld [vmem:[%s166 + $0x14] sm:$0xf]
          %v202 = vld [vmem:[%s166 + $0x18] sm:$0xf]
          %v203 = vld [vmem:[%s166 + $0x1c] sm:$0xf]
          %v204 = vld [vmem:[%s166 + $0x20] sm:$0xf]
          %v205 = vld [vmem:[%s166 + $0x24] sm:$0xf]
          %v206 = vld [vmem:[%s166 + $0x28] sm:$0xf]
          %v207 = vld [vmem:[%s166 + $0x2c] sm:$0xf]
          %v208 = vld [vmem:[%s166 + $0x30] sm:$0xf]
          %v209 = vld [vmem:[%s166 + $0x34] sm:$0xf]
          %v210 = vld [vmem:[%s166 + $0x38] sm:$0xf]
          %v211 = vld [vmem:[%s166 + $0x3c] sm:$0xf]
          %v212 = vld [vmem:[#allocation7] sm:$0xf]
          %v213 = vld [vmem:[#allocation7 + $0x4] sm:$0xf]
          %v214 = vld [vmem:[#allocation7 + $0x8] sm:$0xf]
          %v215 = vld [vmem:[#allocation7 + $0xc] sm:$0xf]
          %v216 = vld [vmem:[#allocation7 + $0x10] sm:$0xf]
          %v217 = vld [vmem:[#allocation7 + $0x14] sm:$0xf]
          %v218 = vld [vmem:[#allocation7 + $0x18] sm:$0xf]
          %v219 = vld [vmem:[#allocation7 + $0x1c] sm:$0xf]
          %v220 = vld [vmem:[#allocation7 + $0x20] sm:$0xf]
          %v221 = vld [vmem:[#allocation7 + $0x24] sm:$0xf]
          %v222 = vld [vmem:[#allocation7 + $0x28] sm:$0xf]
          %v223 = vld [vmem:[#allocation7 + $0x2c] sm:$0xf]
          %v224 = vld [vmem:[#allocation7 + $0x30] sm:$0xf]
          %v225 = vld [vmem:[#allocation7 + $0x34] sm:$0xf]
          %v226 = vld [vmem:[#allocation7 + $0x38] sm:$0xf]
          %v227 = vld [vmem:[#allocation7 + $0x3c] sm:$0xf]
          %v244 = vunpack.c.l.b16 %v196
          %v245 = vunpack.c.l.b16 %v197
          %v246 = vunpack.c.l.b16 %v198
          %v247 = vunpack.c.l.b16 %v199
          %v248 = vunpack.c.l.b16 %v200
          %v249 = vunpack.c.l.b16 %v201
          %v250 = vunpack.c.l.b16 %v202
          %v251 = vunpack.c.l.b16 %v203
          %v252 = vunpack.c.l.b16 %v204
          %v253 = vunpack.c.l.b16 %v205
          %v254 = vunpack.c.l.b16 %v206
          %v255 = vunpack.c.l.b16 %v207
          %v256 = vunpack.c.l.b16 %v208
          %v257 = vunpack.c.l.b16 %v209
          %v258 = vunpack.c.l.b16 %v210
          %v259 = vunpack.c.l.b16 %v211
          %v260 = vpack.c.b16 %v245, %v244
          %v261 = vpack.c.b16 %v247, %v246
          %v262 = vpack.c.b16 %v249, %v248
          %v263 = vpack.c.b16 %v251, %v250
          %v264 = vpack.c.b16 %v253, %v252
          %v265 = vpack.c.b16 %v255, %v254
          %v266 = vpack.c.b16 %v257, %v256
          %v267 = vpack.c.b16 %v259, %v258
          %v292 = vunpack.c.l.b16 %v212
          %v293 = vunpack.c.l.b16 %v213
          %v294 = vunpack.c.l.b16 %v214
          %v295 = vunpack.c.l.b16 %v215
          %v296 = vunpack.c.l.b16 %v216
          %v297 = vunpack.c.l.b16 %v217
          %v298 = vunpack.c.l.b16 %v218
          %v299 = vunpack.c.l.b16 %v219
          %v300 = vunpack.c.l.b16 %v220
          %v301 = vunpack.c.l.b16 %v221
          %v302 = vunpack.c.l.b16 %v222
          %v303 = vunpack.c.l.b16 %v223
          %v304 = vunpack.c.l.b16 %v224
          %v305 = vunpack.c.l.b16 %v225
          %v306 = vunpack.c.l.b16 %v226
          %v307 = vunpack.c.l.b16 %v227
          %v308 = vpack.c.b16 %v293, %v292
          %v309 = vpack.c.b16 %v295, %v294
          %v310 = vpack.c.b16 %v297, %v296
          %v311 = vpack.c.b16 %v299, %v298
          %v312 = vpack.c.b16 %v301, %v300
          %v313 = vpack.c.b16 %v303, %v302
          %v314 = vpack.c.b16 %v305, %v304
          %v315 = vpack.c.b16 %v307, %v306
          %324 = vmatprep.subr.bf16.mxu0 0
          %325 = vmatpush1.bf16.msra.mxu0 %v308
          %326 = vmatprep.subr.bf16.mxu0 0
          %327 = vmatpush1.bf16.msra.mxu0 %v309
          %328 = vmatprep.subr.bf16.mxu0 0
          %329 = vmatpush1.bf16.msra.mxu0 %v310
          %330 = vmatprep.subr.bf16.mxu0 0
          %331 = vmatpush1.bf16.msra.mxu0 %v311
          %332 = vmatprep.subr.bf16.mxu0 0
          %333 = vmatpush1.bf16.msra.mxu0 %v312
          %334 = vmatprep.subr.bf16.mxu0 0
          %335 = vmatpush1.bf16.msra.mxu0 %v313
          %336 = vmatprep.subr.bf16.mxu0 0
          %337 = vmatpush1.bf16.msra.mxu0 %v314
          %338 = vmatprep.subr.bf16.mxu0 0
          %339 = vmatpush1.bf16.msra.mxu0 %v315
          %340 = vmatprep.subr.bf16.mxu0 0
          %341 = vmatpush1.bf16.msra.mxu0 0
          %342 = vmatprep.subr.bf16.mxu0 0
          %343 = vmatpush1.bf16.msra.mxu0 0
          %344 = vmatprep.subr.bf16.mxu0 0
          %345 = vmatpush1.bf16.msra.mxu0 0
          %346 = vmatprep.subr.bf16.mxu0 0
          %347 = vmatpush1.bf16.msra.mxu0 0
          %348 = vmatprep.subr.bf16.mxu0 0
          %349 = vmatpush1.bf16.msra.mxu0 0
          %350 = vmatprep.subr.bf16.mxu0 0
          %351 = vmatpush1.bf16.msra.mxu0 0
          %352 = vmatprep.subr.bf16.mxu0 0
          %353 = vmatpush1.bf16.msra.mxu0 0
          %354 = vmatprep.subr.bf16.mxu0 0
          %355 = vmatpush1.bf16.msra.mxu0 0
          %356 = vmatprep.mubr.bf16.mxu0 0
          %357 = vmatmul.mubr.bf16.gmra.mrb[0].mxu0 %v260
          %v358 = vpop.f32.mrb[0].mxu0
          %v359 = vadd.f32 0.0, %v358
          %v360 = vpop.f32.mrb[0].mxu0
          %v361 = vpop.f32.mrb[0].mxu0
          %v362 = vadd.f32 0.0, %v361
          %v363 = vpop.f32.mrb[0].mxu0
          %364 = vmatprep.mubr.bf16.mxu0 0
          %365 = vmatmul.mubr.bf16.gmra.mrb[0].mxu0 %v261
          %v366 = vpop.f32.mrb[0].mxu0
          %v367 = vadd.f32 0.0, %v366
          %v368 = vpop.f32.mrb[0].mxu0
          %v369 = vpop.f32.mrb[0].mxu0
          %v370 = vadd.f32 0.0, %v369
          %v371 = vpop.f32.mrb[0].mxu0
          %372 = vmatprep.mubr.bf16.mxu0 0
          %373 = vmatmul.mubr.bf16.gmra.mrb[0].mxu0 %v262
          %v374 = vpop.f32.mrb[0].mxu0
          %v375 = vadd.f32 0.0, %v374
          %v376 = vpop.f32.mrb[0].mxu0
          %v377 = vpop.f32.mrb[0].mxu0
          %v378 = vadd.f32 0.0, %v377
          %v379 = vpop.f32.mrb[0].mxu0
          %380 = vmatprep.mubr.bf16.mxu0 0
          %381 = vmatmul.mubr.bf16.gmra.mrb[0].mxu0 %v263
          %v382 = vpop.f32.mrb[0].mxu0
          %v383 = vadd.f32 0.0, %v382
          %v384 = vpop.f32.mrb[0].mxu0
          %v385 = vpop.f32.mrb[0].mxu0
          %v386 = vadd.f32 0.0, %v385
          %v387 = vpop.f32.mrb[0].mxu0
          %388 = vmatprep.mubr.bf16.mxu0 0
          %389 = vmatmul.mubr.bf16.gmra.mrb[0].mxu0 %v264
          %v390 = vpop.f32.mrb[0].mxu0
          %v391 = vadd.f32 0.0, %v390
          %v392 = vpop.f32.mrb[0].mxu0
          %v393 = vpop.f32.mrb[0].mxu0
          %v394 = vadd.f32 0.0, %v393
          %v395 = vpop.f32.mrb[0].mxu0
          %396 = vmatprep.mubr.bf16.mxu0 0
          %397 = vmatmul.mubr.bf16.gmra.mrb[0].mxu0 %v265
          %v398 = vpop.f32.mrb[0].mxu0
          %v399 = vadd.f32 0.0, %v398
          %v400 = vpop.f32.mrb[0].mxu0
          %v401 = vpop.f32.mrb[0].mxu0
          %v402 = vadd.f32 0.0, %v401
          %v403 = vpop.f32.mrb[0].mxu0
          %404 = vmatprep.mubr.bf16.mxu0 0
          %405 = vmatmul.mubr.bf16.gmra.mrb[0].mxu0 %v266
          %v406 = vpop.f32.mrb[0].mxu0
          %v407 = vadd.f32 0.0, %v406
          %v408 = vpop.f32.mrb[0].mxu0
          %v409 = vpop.f32.mrb[0].mxu0
          %v410 = vadd.f32 0.0, %v409
          %v411 = vpop.f32.mrb[0].mxu0
          %412 = vmatprep.mubr.bf16.mxu0 0
          %413 = vmatmul.mubr.bf16.gmra.mrb[0].mxu0 %v267
          %v414 = vpop.f32.mrb[0].mxu0
          %v415 = vadd.f32 0.0, %v414
          %v416 = vpop.f32.mrb[0].mxu0
          %v417 = vpop.f32.mrb[0].mxu0
          %v418 = vadd.f32 0.0, %v417
          %v419 = vpop.f32.mrb[0].mxu0
          %420 = vdwg.mxu0
          %v421 = vunpack.c.l.bf16 %v196
          %v422 = vunpack.c.l.bf16 %v197
          %v423 = vunpack.c.l.bf16 %v198
          %v424 = vunpack.c.l.bf16 %v199
          %v425 = vunpack.c.l.bf16 %v200
          %v426 = vunpack.c.l.bf16 %v201
          %v427 = vunpack.c.l.bf16 %v202
          %v428 = vunpack.c.l.bf16 %v203
          %v429 = vunpack.c.l.bf16 %v204
          %v430 = vunpack.c.l.bf16 %v205
          %v431 = vunpack.c.l.bf16 %v206
          %v432 = vunpack.c.l.bf16 %v207
          %v433 = vunpack.c.l.bf16 %v208
          %v434 = vunpack.c.l.bf16 %v209
          %v435 = vunpack.c.l.bf16 %v210
          %v436 = vunpack.c.l.bf16 %v211
          %v437 = vmul.f32 %v359, %v421
          %v438 = vmul.f32 %v362, %v422
          %v439 = vmul.f32 %v367, %v423
          %v440 = vmul.f32 %v370, %v424
          %v441 = vmul.f32 %v375, %v425
          %v442 = vmul.f32 %v378, %v426
          %v443 = vmul.f32 %v383, %v427
          %v444 = vmul.f32 %v386, %v428
          %v445 = vmul.f32 %v391, %v429
          %v446 = vmul.f32 %v394, %v430
          %v447 = vmul.f32 %v399, %v431
          %v448 = vmul.f32 %v402, %v432
          %v449 = vmul.f32 %v407, %v433
          %v450 = vmul.f32 %v410, %v434
          %v451 = vmul.f32 %v415, %v435
          %v452 = vmul.f32 %v418, %v436
          %453 = vadd.xlane.f32.xlu0 %v437
          %v454 = vpop.xlane.xlu0 %453
          %455 = vadd.xlane.f32.xlu0 %v438
          %v456 = vpop.xlane.xlu0 %455
          %457 = vadd.xlane.f32.xlu0 %v439
          %v458 = vpop.xlane.xlu0 %457
          %459 = vadd.xlane.f32.xlu0 %v440
          %v460 = vpop.xlane.xlu0 %459
          %461 = vadd.xlane.f32.xlu0 %v441
          %v462 = vpop.xlane.xlu0 %461
          %463 = vadd.xlane.f32.xlu0 %v442
          %v464 = vpop.xlane.xlu0 %463
          %465 = vadd.xlane.f32.xlu0 %v443
          %v466 = vpop.xlane.xlu0 %465
          %467 = vadd.xlane.f32.xlu0 %v444
          %v468 = vpop.xlane.xlu0 %467
          %469 = vadd.xlane.f32.xlu0 %v445
          %v470 = vpop.xlane.xlu0 %469
          %471 = vadd.xlane.f32.xlu0 %v446
          %v472 = vpop.xlane.xlu0 %471
          %473 = vadd.xlane.f32.xlu0 %v447
          %v474 = vpop.xlane.xlu0 %473
          %475 = vadd.xlane.f32.xlu0 %v448
          %v476 = vpop.xlane.xlu0 %475
          %477 = vadd.xlane.f32.xlu0 %v449
          %v478 = vpop.xlane.xlu0 %477
          %479 = vadd.xlane.f32.xlu0 %v450
          %v480 = vpop.xlane.xlu0 %479
          %481 = vadd.xlane.f32.xlu0 %v451
          %v482 = vpop.xlane.xlu0 %481
          %483 = vadd.xlane.f32.xlu0 %v452
          %v484 = vpop.xlane.xlu0 %483
          %v485 = vmul.f32 %v454, 0.5
          %v486 = vmul.f32 %v456, 0.5
          %v487 = vmul.f32 %v458, 0.5
          %v488 = vmul.f32 %v460, 0.5
          %v489 = vmul.f32 %v462, 0.5
          %v490 = vmul.f32 %v464, 0.5
          %v491 = vmul.f32 %v466, 0.5
          %v492 = vmul.f32 %v468, 0.5
          %v493 = vmul.f32 %v470, 0.5
          %v494 = vmul.f32 %v472, 0.5
          %v495 = vmul.f32 %v474, 0.5
          %v496 = vmul.f32 %v476, 0.5
          %v497 = vmul.f32 %v478, 0.5
          %v498 = vmul.f32 %v480, 0.5
          %v499 = vmul.f32 %v482, 0.5
          %v500 = vmul.f32 %v484, 0.5
          %vm501 = vcmask 7168
          %502 = vst.msk [vmem:[#allocation3] sm:$0xff] %vm501, %v485
          %503 = vst.msk [vmem:[#allocation3 + $0x8] sm:$0xff] %vm501, %v486
          %504 = vst.msk [vmem:[#allocation3 + $0x10] sm:$0xff] %vm501, %v487
          %505 = vst.msk [vmem:[#allocation3 + $0x18] sm:$0xff] %vm501, %v488
          %506 = vst.msk [vmem:[#allocation3 + $0x20] sm:$0xff] %vm501, %v489
          %507 = vst.msk [vmem:[#allocation3 + $0x28] sm:$0xff] %vm501, %v490
          %508 = vst.msk [vmem:[#allocation3 + $0x30] sm:$0xff] %vm501, %v491
          %509 = vst.msk [vmem:[#allocation3 + $0x38] sm:$0xff] %vm501, %v492
          %510 = vst.msk [vmem:[#allocation3 + $0x40] sm:$0xff] %vm501, %v493
          %511 = vst.msk [vmem:[#allocation3 + $0x48] sm:$0xff] %vm501, %v494
          %512 = vst.msk [vmem:[#allocation3 + $0x50] sm:$0xff] %vm501, %v495
          %513 = vst.msk [vmem:[#allocation3 + $0x58] sm:$0xff] %vm501, %v496
          %514 = vst.msk [vmem:[#allocation3 + $0x60] sm:$0xff] %vm501, %v497
          %515 = vst.msk [vmem:[#allocation3 + $0x68] sm:$0xff] %vm501, %v498
          %516 = vst.msk [vmem:[#allocation3 + $0x70] sm:$0xff] %vm501, %v499
          %517 = vst.msk [vmem:[#allocation3 + $0x78] sm:$0xff] %vm501, %v500
          %v518 = vpack.c.bf16 %v362, %v359
          %v519 = vpack.c.bf16 %v370, %v367
          %v520 = vpack.c.bf16 %v378, %v375
          %v521 = vpack.c.bf16 %v386, %v383
          %v522 = vpack.c.bf16 %v394, %v391
          %v523 = vpack.c.bf16 %v402, %v399
          %v524 = vpack.c.bf16 %v410, %v407
          %v525 = vpack.c.bf16 %v418, %v415
          %526 = vst [vmem:[#allocation2] sm:$0xff] %v518
          %527 = vst [vmem:[#allocation2 + $0x8] sm:$0xff] %v519
          %528 = vst [vmem:[#allocation2 + $0x10] sm:$0xff] %v520
          %529 = vst [vmem:[#allocation2 + $0x18] sm:$0xff] %v521
          %530 = vst [vmem:[#allocation2 + $0x20] sm:$0xff] %v522
          %531 = vst [vmem:[#allocation2 + $0x28] sm:$0xff] %v523
          %532 = vst [vmem:[#allocation2 + $0x30] sm:$0xff] %v524
          %533 = vst [vmem:[#allocation2 + $0x38] sm:$0xff] %v525
        $region40: #{tpu_custom_call.1} parent=27 // pred_fallthru
          _
        %s534 = smul.u32 %s25, 128
        %s535 = sshra.s32 %s534, 3
        %s536 = sand.u32 %s534, 7
        %s537 = smul.addr %s535, 4
        %s538 = scalar_lea.vmem %s166, %s537 [#allocation4]
        %v539 = vld [vmem:[%s538] sm:$0xf]
        %v540 = vld [vmem:[%s538 + $0x4] sm:$0xf]
        %v541 = vld [vmem:[%s538 + $0x8] sm:$0xf]
        %v542 = vld [vmem:[%s538 + $0xc] sm:$0xf]
        %v543 = vld [vmem:[%s538 + $0x10] sm:$0xf]
        %v544 = vld [vmem:[%s538 + $0x14] sm:$0xf]
        %v545 = vld [vmem:[%s538 + $0x18] sm:$0xf]
        %v546 = vld [vmem:[%s538 + $0x1c] sm:$0xf]
        %v547 = vld [vmem:[%s538 + $0x20] sm:$0xf]
        %v548 = vld [vmem:[%s538 + $0x24] sm:$0xf]
        %v549 = vld [vmem:[%s538 + $0x28] sm:$0xf]
        %v550 = vld [vmem:[%s538 + $0x2c] sm:$0xf]
        %v551 = vld [vmem:[%s538 + $0x30] sm:$0xf]
        %v552 = vld [vmem:[%s538 + $0x34] sm:$0xf]
        %v553 = vld [vmem:[%s538 + $0x38] sm:$0xf]
        %v554 = vld [vmem:[%s538 + $0x3c] sm:$0xf]
        %v555 = vld [vmem:[#allocation2] sm:$0xff]
        %v556 = vld [vmem:[#allocation2 + $0x8] sm:$0xff]
        %v557 = vld [vmem:[#allocation2 + $0x10] sm:$0xff]
        %v558 = vld [vmem:[#allocation2 + $0x18] sm:$0xff]
        %v559 = vld [vmem:[#allocation2 + $0x20] sm:$0xff]
        %v560 = vld [vmem:[#allocation2 + $0x28] sm:$0xff]
        %v561 = vld [vmem:[#allocation2 + $0x30] sm:$0xff]
        %v562 = vld [vmem:[#allocation2 + $0x38] sm:$0xff]
        %v579 = vunpack.c.l.b16 %v539
        %v580 = vunpack.c.l.b16 %v540
        %v581 = vunpack.c.l.b16 %v541
        %v582 = vunpack.c.l.b16 %v542
        %v583 = vunpack.c.l.b16 %v543
        %v584 = vunpack.c.l.b16 %v544
        %v585 = vunpack.c.l.b16 %v545
        %v586 = vunpack.c.l.b16 %v546
        %v587 = vunpack.c.l.b16 %v547
        %v588 = vunpack.c.l.b16 %v548
        %v589 = vunpack.c.l.b16 %v549
        %v590 = vunpack.c.l.b16 %v550
        %v591 = vunpack.c.l.b16 %v551
        %v592 = vunpack.c.l.b16 %v552
        %v593 = vunpack.c.l.b16 %v553
        %v594 = vunpack.c.l.b16 %v554
        %v595 = vpack.c.b16 %v580, %v579
        %v596 = vpack.c.b16 %v582, %v581
        %v597 = vpack.c.b16 %v584, %v583
        %v598 = vpack.c.b16 %v586, %v585
        %v599 = vpack.c.b16 %v588, %v587
        %v600 = vpack.c.b16 %v590, %v589
        %v601 = vpack.c.b16 %v592, %v591
        %v602 = vpack.c.b16 %v594, %v593
        %611 = vmatprep.subr.bf16.mxu0 0
        %612 = vmatpush1.bf16.xpose.msra.mxu0 %v595
        %613 = vmatprep.subr.bf16.mxu0 0
        %614 = vmatpush1.bf16.xpose.msra.mxu0 %v596
        %615 = vmatprep.subr.bf16.mxu0 0
        %616 = vmatpush1.bf16.xpose.msra.mxu0 %v597
        %617 = vmatprep.subr.bf16.mxu0 0
        %618 = vmatpush1.bf16.xpose.msra.mxu0 %v598
        %619 = vmatprep.subr.bf16.mxu0 0
        %620 = vmatpush1.bf16.xpose.msra.mxu0 %v599
        %621 = vmatprep.subr.bf16.mxu0 0
        %622 = vmatpush1.bf16.xpose.msra.mxu0 %v600
        %623 = vmatprep.subr.bf16.mxu0 0
        %624 = vmatpush1.bf16.xpose.msra.mxu0 %v601
        %625 = vmatprep.subr.bf16.mxu0 0
        %626 = vmatpush1.bf16.xpose.msra.mxu0 %v602
        %627 = vmatprep.subr.bf16.mxu0 0
        %628 = vmatpush1.bf16.xpose.msra.mxu0 0
        %629 = vmatprep.subr.bf16.mxu0 0
        %630 = vmatpush1.bf16.xpose.msra.mxu0 0
        %631 = vmatprep.subr.bf16.mxu0 0
        %632 = vmatpush1.bf16.xpose.msra.mxu0 0
        %633 = vmatprep.subr.bf16.mxu0 0
        %634 = vmatpush1.bf16.xpose.msra.mxu0 0
        %635 = vmatprep.subr.bf16.mxu0 0
        %636 = vmatpush1.bf16.xpose.msra.mxu0 0
        %637 = vmatprep.subr.bf16.mxu0 0
        %638 = vmatpush1.bf16.xpose.msra.mxu0 0
        %639 = vmatprep.subr.bf16.mxu0 0
        %640 = vmatpush1.bf16.xpose.msra.mxu0 0
        %641 = vmatprep.subr.bf16.mxu0 0
        %642 = vmatpush1.bf16.xpose.msra.mxu0 0
        %643 = vmatprep.mubr.bf16.mxu0 0
        %644 = vmatmul.mubr.bf16.gmra.mrb[0].mxu0 %v555
        %v645 = vpop.f32.mrb[0].mxu0
        %v646 = vadd.f32 0.0, %v645
        %v647 = vpop.f32.mrb[0].mxu0
        %v648 = vpop.f32.mrb[0].mxu0
        %v649 = vadd.f32 0.0, %v648
        %v650 = vpop.f32.mrb[0].mxu0
        %651 = vmatprep.mubr.bf16.mxu0 0
        %652 = vmatmul.mubr.bf16.gmra.mrb[0].mxu0 %v556
        %v653 = vpop.f32.mrb[0].mxu0
        %v654 = vadd.f32 0.0, %v653
        %v655 = vpop.f32.mrb[0].mxu0
        %v656 = vpop.f32.mrb[0].mxu0
        %v657 = vadd.f32 0.0, %v656
        %v658 = vpop.f32.mrb[0].mxu0
        %659 = vmatprep.mubr.bf16.mxu0 0
        %660 = vmatmul.mubr.bf16.gmra.mrb[0].mxu0 %v557
        %v661 = vpop.f32.mrb[0].mxu0
        %v662 = vadd.f32 0.0, %v661
        %v663 = vpop.f32.mrb[0].mxu0
        %v664 = vpop.f32.mrb[0].mxu0
        %v665 = vadd.f32 0.0, %v664
        %v666 = vpop.f32.mrb[0].mxu0
        %667 = vmatprep.mubr.bf16.mxu0 0
        %668 = vmatmul.mubr.bf16.gmra.mrb[0].mxu0 %v558
        %v669 = vpop.f32.mrb[0].mxu0
        %v670 = vadd.f32 0.0, %v669
        %v671 = vpop.f32.mrb[0].mxu0
        %v672 = vpop.f32.mrb[0].mxu0
        %v673 = vadd.f32 0.0, %v672
        %v674 = vpop.f32.mrb[0].mxu0
        %675 = vmatprep.mubr.bf16.mxu0 0
        %676 = vmatmul.mubr.bf16.gmra.mrb[0].mxu0 %v559
        %v677 = vpop.f32.mrb[0].mxu0
        %v678 = vadd.f32 0.0, %v677
        %v679 = vpop.f32.mrb[0].mxu0
        %v680 = vpop.f32.mrb[0].mxu0
        %v681 = vadd.f32 0.0, %v680
        %v682 = vpop.f32.mrb[0].mxu0
        %683 = vmatprep.mubr.bf16.mxu0 0
        %684 = vmatmul.mubr.bf16.gmra.mrb[0].mxu0 %v560
        %v685 = vpop.f32.mrb[0].mxu0
        %v686 = vadd.f32 0.0, %v685
        %v687 = vpop.f32.mrb[0].mxu0
        %v688 = vpop.f32.mrb[0].mxu0
        %v689 = vadd.f32 0.0, %v688
        %v690 = vpop.f32.mrb[0].mxu0
        %691 = vmatprep.mubr.bf16.mxu0 0
        %692 = vmatmul.mubr.bf16.gmra.mrb[0].mxu0 %v561
        %v693 = vpop.f32.mrb[0].mxu0
        %v694 = vadd.f32 0.0, %v693
        %v695 = vpop.f32.mrb[0].mxu0
        %v696 = vpop.f32.mrb[0].mxu0
        %v697 = vadd.f32 0.0, %v696
        %v698 = vpop.f32.mrb[0].mxu0
        %699 = vmatprep.mubr.bf16.mxu0 0
        %700 = vmatmul.mubr.bf16.gmra.mrb[0].mxu0 %v562
        %v701 = vpop.f32.mrb[0].mxu0
        %v702 = vadd.f32 0.0, %v701
        %v703 = vpop.f32.mrb[0].mxu0
        %v704 = vpop.f32.mrb[0].mxu0
        %v705 = vadd.f32 0.0, %v704
        %v706 = vpop.f32.mrb[0].mxu0
        %707 = vdwg.mxu0
        %v708 = vld [vmem:[#allocation3] sm:$0xff]
        %v709 = vld [vmem:[#allocation3 + $0x8] sm:$0xff]
        %v710 = vld [vmem:[#allocation3 + $0x10] sm:$0xff]
        %v711 = vld [vmem:[#allocation3 + $0x18] sm:$0xff]
        %v712 = vld [vmem:[#allocation3 + $0x20] sm:$0xff]
        %v713 = vld [vmem:[#allocation3 + $0x28] sm:$0xff]
        %v714 = vld [vmem:[#allocation3 + $0x30] sm:$0xff]
        %v715 = vld [vmem:[#allocation3 + $0x38] sm:$0xff]
        %v716 = vld [vmem:[#allocation3 + $0x40] sm:$0xff]
        %v717 = vld [vmem:[#allocation3 + $0x48] sm:$0xff]
        %v718 = vld [vmem:[#allocation3 + $0x50] sm:$0xff]
        %v719 = vld [vmem:[#allocation3 + $0x58] sm:$0xff]
        %v720 = vld [vmem:[#allocation3 + $0x60] sm:$0xff]
        %v721 = vld [vmem:[#allocation3 + $0x68] sm:$0xff]
        %v722 = vld [vmem:[#allocation3 + $0x70] sm:$0xff]
        %v723 = vld [vmem:[#allocation3 + $0x78] sm:$0xff]
        %s724 = scalar_lea.vmem [#allocation3], %s534
        %v725 = vld [vmem:[%s724] sm:$0xff]
        %v726 = vld [vmem:[%s724 + $0x8] sm:$0xff]
        %v727 = vld [vmem:[%s724 + $0x10] sm:$0xff]
        %v728 = vld [vmem:[%s724 + $0x18] sm:$0xff]
        %v729 = vld [vmem:[%s724 + $0x20] sm:$0xff]
        %v730 = vld [vmem:[%s724 + $0x28] sm:$0xff]
        %v731 = vld [vmem:[%s724 + $0x30] sm:$0xff]
        %v732 = vld [vmem:[%s724 + $0x38] sm:$0xff]
        %v733 = vld [vmem:[%s724 + $0x40] sm:$0xff]
        %v734 = vld [vmem:[%s724 + $0x48] sm:$0xff]
        %v735 = vld [vmem:[%s724 + $0x50] sm:$0xff]
        %v736 = vld [vmem:[%s724 + $0x58] sm:$0xff]
        %v737 = vld [vmem:[%s724 + $0x60] sm:$0xff]
        %v738 = vld [vmem:[%s724 + $0x68] sm:$0xff]
        %v739 = vld [vmem:[%s724 + $0x70] sm:$0xff]
        %v740 = vld [vmem:[%s724 + $0x78] sm:$0xff]
        %741 = vxpose.xlu0.b32.start [1/16] %v725, 128
        %742 = vxpose.xlu0.b32.cont [2/16] %v726, 128
        %743 = vxpose.xlu0.b32.cont [3/16] %v727, 128
        %744 = vxpose.xlu0.b32.cont [4/16] %v728, 128
        %745 = vxpose.xlu0.b32.cont [5/16] %v729, 128
        %746 = vxpose.xlu0.b32.cont [6/16] %v730, 128
        %747 = vxpose.xlu0.b32.cont [7/16] %v731, 128
        %748 = vxpose.xlu0.b32.cont [8/16] %v732, 128
        %749 = vxpose.xlu0.b32.cont [9/16] %v733, 128
        %750 = vxpose.xlu0.b32.cont [10/16] %v734, 128
        %751 = vxpose.xlu0.b32.cont [11/16] %v735, 128
        %752 = vxpose.xlu0.b32.cont [12/16] %v736, 128
        %753 = vxpose.xlu0.b32.cont [13/16] %v737, 128
        %754 = vxpose.xlu0.b32.cont [14/16] %v738, 128
        %755 = vxpose.xlu0.b32.cont [15/16] %v739, 128
        %756 = vxpose.xlu0.b32.end [16/16] %v740, 128
        %v757 = vpop.trf.xlu0
        %v758 = vpop.trf.xlu0
        %v759 = vpop.trf.xlu0
        %v760 = vpop.trf.xlu0
        %v761 = vpop.trf.xlu0
        %v762 = vpop.trf.xlu0
        %v763 = vpop.trf.xlu0
        %v764 = vpop.trf.xlu0
        %v765 = vpop.trf.xlu0
        %v766 = vpop.trf.xlu0
        %v767 = vpop.trf.xlu0
        %v768 = vpop.trf.xlu0
        %v769 = vpop.trf.xlu0
        %v770 = vpop.trf.xlu0
        %v771 = vpop.trf.xlu0
        %v772 = vpop.trf.xlu0
        %774 = vset.pattern.permute.xlu0 0
        %775 = vperm.xlu0 %774, %v708
        %v776 = vpop.permute.xlu0 %775
        %779 = vset.pattern.permute.xlu0 0
        %780 = vperm.xlu0 %779, %v709
        %v781 = vpop.permute.xlu0 %780
        %784 = vset.pattern.permute.xlu0 0
        %785 = vperm.xlu0 %784, %v710
        %v786 = vpop.permute.xlu0 %785
        %789 = vset.pattern.permute.xlu0 0
        %790 = vperm.xlu0 %789, %v711
        %v791 = vpop.permute.xlu0 %790
        %794 = vset.pattern.permute.xlu0 0
        %795 = vperm.xlu0 %794, %v712
        %v796 = vpop.permute.xlu0 %795
        %799 = vset.pattern.permute.xlu0 0
        %800 = vperm.xlu0 %799, %v713
        %v801 = vpop.permute.xlu0 %800
        %804 = vset.pattern.permute.xlu0 0
        %805 = vperm.xlu0 %804, %v714
        %v806 = vpop.permute.xlu0 %805
        %809 = vset.pattern.permute.xlu0 0
        %810 = vperm.xlu0 %809, %v715
        %v811 = vpop.permute.xlu0 %810
        %814 = vset.pattern.permute.xlu0 0
        %815 = vperm.xlu0 %814, %v716
        %v816 = vpop.permute.xlu0 %815
        %819 = vset.pattern.permute.xlu0 0
        %820 = vperm.xlu0 %819, %v717
        %v821 = vpop.permute.xlu0 %820
        %824 = vset.pattern.permute.xlu0 0
        %825 = vperm.xlu0 %824, %v718
        %v826 = vpop.permute.xlu0 %825
        %829 = vset.pattern.permute.xlu0 0
        %830 = vperm.xlu0 %829, %v719
        %v831 = vpop.permute.xlu0 %830
        %834 = vset.pattern.permute.xlu0 0
        %835 = vperm.xlu0 %834, %v720
        %v836 = vpop.permute.xlu0 %835
        %839 = vset.pattern.permute.xlu0 0
        %840 = vperm.xlu0 %839, %v721
        %v841 = vpop.permute.xlu0 %840
        %844 = vset.pattern.permute.xlu0 0
        %845 = vperm.xlu0 %844, %v722
        %v846 = vpop.permute.xlu0 %845
        %849 = vset.pattern.permute.xlu0 0
        %850 = vperm.xlu0 %849, %v723
        %v851 = vpop.permute.xlu0 %850
        %v853 = vlaneseq
        %v854 = vshrl.u32 %v853, 7
        %v855 = vsub.s32 0, %v854
        %v856 = vrot.slane %v757, %v855
        %v857 = vadd.f32 %v776, %v856
        %v858 = vadd.f32 %v781, %v856
        %v859 = vadd.f32 %v786, %v856
        %v860 = vadd.f32 %v791, %v856
        %v861 = vadd.f32 %v796, %v856
        %v862 = vadd.f32 %v801, %v856
        %v863 = vadd.f32 %v806, %v856
        %v864 = vadd.f32 %v811, %v856
        %v865 = vadd.f32 %v816, %v856
        %v866 = vadd.f32 %v821, %v856
        %v867 = vadd.f32 %v826, %v856
        %v868 = vadd.f32 %v831, %v856
        %v869 = vadd.f32 %v836, %v856
        %v870 = vadd.f32 %v841, %v856
        %v871 = vadd.f32 %v846, %v856
        %v872 = vadd.f32 %v851, %v856
        %v873 = vsub.f32 %v857, %v646
        %v874 = vsub.f32 %v858, %v649
        %v875 = vsub.f32 %v859, %v654
        %v876 = vsub.f32 %v860, %v657
        %v877 = vsub.f32 %v861, %v662
        %v878 = vsub.f32 %v862, %v665
        %v879 = vsub.f32 %v863, %v670
        %v880 = vsub.f32 %v864, %v673
        %v881 = vsub.f32 %v865, %v678
        %v882 = vsub.f32 %v866, %v681
        %v883 = vsub.f32 %v867, %v686
        %v884 = vsub.f32 %v868, %v689
        %v885 = vsub.f32 %v869, %v694
        %v886 = vsub.f32 %v870, %v697
        %v887 = vsub.f32 %v871, %v702
        %v888 = vsub.f32 %v872, %v705
        %889 = vst [vmem:[%s190] sm:$0xff] %v873
        %890 = vst [vmem:[%s190 + $0x8] sm:$0xff] %v874
        %891 = vst [vmem:[%s190 + $0x10] sm:$0xff] %v875
        %892 = vst [vmem:[%s190 + $0x18] sm:$0xff] %v876
        %893 = vst [vmem:[%s190 + $0x20] sm:$0xff] %v877
        %894 = vst [vmem:[%s190 + $0x28] sm:$0xff] %v878
        %895 = vst [vmem:[%s190 + $0x30] sm:$0xff] %v879
        %896 = vst [vmem:[%s190 + $0x38] sm:$0xff] %v880
        %897 = vst [vmem:[%s190 + $0x40] sm:$0xff] %v881
        %898 = vst [vmem:[%s190 + $0x48] sm:$0xff] %v882
        %899 = vst [vmem:[%s190 + $0x50] sm:$0xff] %v883
        %900 = vst [vmem:[%s190 + $0x58] sm:$0xff] %v884
        %901 = vst [vmem:[%s190 + $0x60] sm:$0xff] %v885
        %902 = vst [vmem:[%s190 + $0x68] sm:$0xff] %v886
        %903 = vst [vmem:[%s190 + $0x70] sm:$0xff] %v887
        %904 = vst [vmem:[%s190 + $0x78] sm:$0xff] %v888
        %s905 = sand.u32 %s89, 1
        %s906 = scalar_lea.sflag [#allocation6], %s905
        %s907 = sand.u32 %s89, 1
        %s908 = smul.addr %s907, 128
        %s909 = scalar_lea.vmem [#allocation9], %s908
        // Predicated region
        $region41: #{tpu_custom_call.1} parent=27 // pred_check
          %p910 = pneg %p99
        $region42: #{tpu_custom_call.1} parent=27 // pred_check_branch
          %912 = sbr.rel (%p910) target = $region44
        $region43: #{tpu_custom_call.1} parent=27 // pred_region
          %s914 = ssub.s32 2048, 2048
          %915 = vsyncadd %s906, %s914
          %s916 = smul.addr %s24, 16
          %s917 = sadd.s32 %s25, %s916
          %s918 = smul.addr %s917, 128
          %s919 = scalar_lea.hbm %s2, %s918
          %s920 = sshll.u32 %s909, 4
          %s921 = int_to_ptr.vmem [resolvable:$true] %s920
          %926 = dma.vmem_to_hbm [thread:$0]  %s921, 2048, %s919, %s906, 128, 128, 8
        $region44: #{tpu_custom_call.1} parent=27 // pred_fallthru
          _
      $region28: #{tpu_custom_call.1} parent=5 // pred_fallthru
        _
      %p927 = scmp.le.s32.totalorder 2, %s15
      // Predicated region
      $region45: #{tpu_custom_call.1} parent=5 // pred_check
        %p928 = pneg %p927
      $region46: #{tpu_custom_call.1} parent=5 // pred_check_branch
        %930 = sbr.rel (%p928) target = $region48
      $region47: #{tpu_custom_call.1} parent=5 // pred_region
        %s931 = ssub.s32 %s15, 2
        // Predicated region
        $region49: #{tpu_custom_call.1} parent=47 // pred_check
          %p932 = pneg %p105
        $region50: #{tpu_custom_call.1} parent=47 // pred_check_branch
          %934 = sbr.rel (%p932) target = $region52
        $region51: #{tpu_custom_call.1} parent=47 // pred_region
          %s935 = sand.u32 %s90, 1
          %s936 = scalar_lea.sflag [#allocation6], %s935
          %s937 = sand.u32 %s90, 1
          %s938 = smul.addr %s937, 128
          %s939 = scalar_lea.vmem [#allocation9], %s938
          %940 = dma.done %s936, 2048
        $region52: #{tpu_custom_call.1} parent=47 // pred_fallthru
          _
      $region48: #{tpu_custom_call.1} parent=5 // pred_fallthru
        _
    $region6: #{tpu_custom_call.1} parent=1 // loop_footer
      %s19 = sadd.s32 1, %s15
    $region7: #{tpu_custom_call.1} parent=1 // loop_footer_branch
      %14 = sbr.rel target = $region3
    $region8: #{tpu_custom_call.1} parent=1 // loop_exit
      _
    %941 = vsyncpa [#allocation5], 1
    %s942 = scalar_lea.sflag [#allocation5], 1
    %943 = vsyncpa %s942, 1
    %944 = vsyncpa [#allocation8], 1
    %945 = vsyncpa [#allocation6], 1
    %s946 = scalar_lea.sflag [#allocation6], 1
    %947 = vsyncpa %s946, 1

// kernel: tpu_custom_call.1
$region0: #{tpu_custom_call.1}
  #allocation0 [shape = 'u32[]', space=smem, size = 0x4, offset = 0x4, fixed_abs, tag = 'smem constant byte address 0x4 - core index']
  #allocation1 [shape = 'u32[144,128]{1,0:T(1,128)}', space=vmem, size = 0x12000, scoped, tag = 'internal scratch']
  #allocation2 [shape = 'bf16[1,128,128]{2,1,0:T(16,128)(2,1)}', space=vmem, size = 0x8000, scoped, tag = 'scratch operand']
  #allocation3 [shape = 'f32[1,128,1]{2,1,0:T(8,128)}', space=vmem, size = 0x10000, scoped, tag = 'scratch operand']
  %s0 = inlined_call_operand.hbm [shape: bf16[2,128,128], index: 0, kind: input, shape index: {}]
  %s1 = inlined_call_operand.hbm [shape: bf16[128,128], index: 1, kind: input, shape index: {}]
  %s2 = inlined_call_operand.hbm [shape: f32[2,128,128], index: 2, kind: output, shape index: {}]
  %s3 = sld [smem:[#allocation0]]
  $region53: #{tpu_custom_call.1} parent=0
    _
  %s5 = ssub.s32 1, %s3
  %s6 = scalar_select 0, %s5, %s3
  $region1: #{tpu_custom_call.1} parent=0
    #allocation4 [shape = 'u8[65536]{0}', space=vmem, size = 0x10000, scoped, tag = 'input window, operand 0']
    #allocation5 [shape = 's32[2]{0}', space=sflag, size = 0x8, scoped, tag = 'scoped memory for tpu_custom_call.1']
    #allocation6 [shape = 's32[2]{0}', space=sflag, size = 0x8, scoped, tag = 'scoped memory for tpu_custom_call.1']
    #allocation7 [shape = 'u8[32768]{0}', space=vmem, size = 0x8000, scoped, tag = 'input window, operand 1, single buffered']
    #allocation8 [shape = 's32[1]{0}', space=sflag, size = 0x4, scoped, tag = 'scoped memory for tpu_custom_call.1']
    #allocation9 [shape = 'u8[131072]{0}', space=vmem, size = 0x20000, scoped, tag = 'output window, operand 0']
    %7 = vsyncpa [#allocation5], 0
    %s8 = scalar_lea.sflag [#allocation5], 1
    %9 = vsyncpa %s8, 0
    %10 = vsyncpa [#allocation8], 0
    %11 = vsyncpa [#allocation6], 0
    %s12 = scalar_lea.sflag [#allocation6], 1
    %13 = vsyncpa %s12, 0
    loop: start=0, step=1, limit=4
    $region2: #{tpu_custom_call.1} parent=1 // loop_pre_header
      _
    $region3: #{tpu_custom_call.1} parent=1 // loop_header
      %s15 = sphi 0, %s19
      %p16 = scmp.ge.s32.totalorder %s15, 4
      %s22 = sphi 0, %s34
      %s23 = sphi 0, %s30
      %s24 = sphi 0, %s22
      %s25 = sphi 0, %s23
      %s26 = sphi 0, %s24
      %s27 = sphi 0, %s25
      %s37 = sphi 0, %s39
      %s40 = sphi 0, %s37
      %s41 = sphi 0, %s40
      %s57 = sphi 0, %s41
      %s61 = sphi 0, %s61
      %s63 = sphi 0, %s61
      %s64 = sphi 0, %s63
      %s78 = sphi 0, %s64
      %s86 = sphi 0, %s88
      %s89 = sphi 0, %s86
      %s90 = sphi 0, %s89
      %s106 = sphi 0, %s90
    $region4: #{tpu_custom_call.1} parent=1 // loop_header_branch
      %18 = sbr.rel (%p16) target = $region8
    $region5: #{tpu_custom_call.1} parent=1 // loop_body
      %s20 = ssub.s32 %s15, 1
      %s21 = ssub.s32 %s15, 2
      %s28 = sadd.s32 1, %s23
      %p29 = scmp.ge.s32.totalorder %s28, 1
      %s30 = scalar_select %p29, 0, %s28
      %s31 = sadd.s32 1, %s22
      %s32 = scalar_select %p29, %s31, %s22
      %p33 = scmp.ge.s32.totalorder %s32, 2
      %s34 = scalar_select %p33, 0, %s32
      %s35 = ssub.s32 %s22, %s34
      %p36 = scmp.eq.s32.totalorder %s35, 0
      %s38 = sadd.s32 %s37, 1
      %s39 = scalar_select %p36, %s37, %s38
      %p42 = pneg %p36
      %p43 = scmp.eq.s32.totalorder %s15, 1
      %p44 = por %p42, %p43
      %p45 = scmp.ne.s32.totalorder %s37, %s40
      %p46 = scmp.eq.s32.totalorder %s15, 0
      %p47 = por %p45, %p46
      %p48 = scmp.ne.s32.totalorder %s37, %s40
      %p49 = scmp.eq.s32.totalorder %s20, 1
      %p50 = por %p48, %p49
      %p51 = scmp.ne.s32.totalorder %s40, %s41
      %p52 = scmp.eq.s32.totalorder %s20, 0
      %p53 = por %p51, %p52
      %p54 = scmp.ne.s32.totalorder %s40, %s41
      %p55 = scmp.eq.s32.totalorder %s21, 1
      %p56 = por %p54, %p55
      %p58 = scmp.ne.s32.totalorder %s41, %s57
      %p59 = scmp.eq.s32.totalorder %s21, 0
      %p60 = por %p58, %p59
      %s62 = sadd.s32 %s61, 1
      %p65 = scmp.eq.s32.totalorder %s15, 1
      %p66 = scmp.ne.s32.totalorder %s61, %s63
      %p67 = scmp.eq.s32.totalorder %s15, 0
      %p68 = por %p66, %p67
      %p69 = scmp.ne.s32.totalorder %s61, %s63
      %p70 = scmp.eq.s32.totalorder %s20, 1
      %p71 = por %p69, %p70
      %p72 = scmp.ne.s32.totalorder %s63, %s64
      %p73 = scmp.eq.s32.totalorder %s20, 0
      %p74 = por %p72, %p73
      %p75 = scmp.ne.s32.totalorder %s63, %s64
      %p76 = scmp.eq.s32.totalorder %s21, 1
      %p77 = por %p75, %p76
      %p79 = scmp.ne.s32.totalorder %s64, %s78
      %p80 = scmp.eq.s32.totalorder %s21, 0
      %p81 = por %p79, %p80
      %s82 = ssub.s32 %s22, %s34
      %s83 = ssub.s32 %s23, %s30
      %s84 = sor.u32 %s82, %s83
      %p85 = scmp.eq.s32.totalorder %s84, 0
      %s87 = sadd.s32 %s86, 1
      %s88 = scalar_select %p85, %s86, %s87
      %p91 = pneg %p85
      %p92 = scmp.eq.s32.totalorder %s15, 1
      %p93 = por %p91, %p92
      %p94 = scmp.ne.s32.totalorder %s86, %s89
      %p95 = scmp.eq.s32.totalorder %s15, 0
      %p96 = por %p94, %p95
      %p97 = scmp.ne.s32.totalorder %s86, %s89
      %p98 = scmp.eq.s32.totalorder %s20, 1
      %p99 = por %p97, %p98
      %p100 = scmp.ne.s32.totalorder %s89, %s90
      %p101 = scmp.eq.s32.totalorder %s20, 0
      %p102 = por %p100, %p101
      %p103 = scmp.ne.s32.totalorder %s89, %s90
      %p104 = scmp.eq.s32.totalorder %s21, 1
      %p105 = por %p103, %p104
      %p107 = scmp.ne.s32.totalorder %s90, %s106
      %p108 = scmp.eq.s32.totalorder %s21, 0
      %p109 = por %p107, %p108
      %p110 = scmp.le.s32.totalorder 1, %s15
      %p111 = scmp.lt.s32.totalorder %s15, 3
      %p112 = pnand %p110, %p111
      %p113 = pneg %p112
      // Predicated region
      $region9: #{tpu_custom_call.1} parent=5 // pred_check
        _
      $region10: #{tpu_custom_call.1} parent=5 // pred_check_branch
        %115 = sbr.rel (%p112) target = $region12
      $region11: #{tpu_custom_call.1} parent=5 // pred_region
        %s116 = ssub.s32 %s15, 1
        // Predicated region
        $region13: #{tpu_custom_call.1} parent=11 // pred_check
          %p117 = pneg %p74
        $region14: #{tpu_custom_call.1} parent=11 // pred_check_branch
          %119 = sbr.rel (%p117) target = $region16
        $region15: #{tpu_custom_call.1} parent=11 // pred_region
          %s121 = ssub.s32 1024, 1024
          %122 = vsyncadd [#allocation8], %s121
          %s123 = sshll.u32 [#allocation7], 4
          %s124 = int_to_ptr.vmem [resolvable:$true] %s123
          %129 = dma.hbm_to_vmem [thread:$0]  %s1, 1024, %s124, [#allocation8], 64, 64, 4
        $region16: #{tpu_custom_call.1} parent=11 // pred_fallthru
          _
      $region12: #{tpu_custom_call.1} parent=5 // pred_fallthru
        _
      %p130 = scmp.lt.s32.totalorder %s15, 2
      // Predicated region
      $region17: #{tpu_custom_call.1} parent=5 // pred_check
        %p131 = pneg %p130
      $region18: #{tpu_custom_call.1} parent=5 // pred_check_branch
        %133 = sbr.rel (%p131) target = $region20
      $region19: #{tpu_custom_call.1} parent=5 // pred_region
        // Predicated region
        $region21: #{tpu_custom_call.1} parent=19 // pred_check
          %p134 = pneg %p47
        $region22: #{tpu_custom_call.1} parent=19 // pred_check_branch
          %136 = sbr.rel (%p134) target = $region24
        $region23: #{tpu_custom_call.1} parent=19 // pred_region
          %s137 = sand.u32 %s37, 1
          %s138 = scalar_lea.sflag [#allocation5], %s137
          %s139 = sand.u32 %s37, 1
          %s140 = smul.addr %s139, 64
          %s141 = scalar_lea.vmem [#allocation4], %s140
          %s143 = ssub.s32 1024, 1024
          %144 = vsyncadd %s138, %s143
          %s145 = smul.addr %s22, 16
          %s146 = smul.addr %s145, 64
          %s147 = scalar_lea.hbm %s0, %s146
          %s148 = sshll.u32 %s141, 4
          %s149 = int_to_ptr.vmem [resolvable:$true] %s148
          %154 = dma.hbm_to_vmem [thread:$0]  %s147, 1024, %s149, %s138, 64, 64, 4
        $region24: #{tpu_custom_call.1} parent=19 // pred_fallthru
          _
      $region20: #{tpu_custom_call.1} parent=5 // pred_fallthru
        _
      %p155 = scmp.le.s32.totalorder 1, %s15
      %p156 = scmp.lt.s32.totalorder %s15, 3
      %p157 = pnand %p155, %p156
      %p158 = pneg %p157
      // Predicated region
      $region25: #{tpu_custom_call.1} parent=5 // pred_check
        _
      $region26: #{tpu_custom_call.1} parent=5 // pred_check_branch
        %160 = sbr.rel (%p157) target = $region28
      $region27: #{tpu_custom_call.1} parent=5 // pred_region
        %s161 = ssub.s32 %s15, 1
        %s162 = sand.u32 %s40, 1
        %s163 = scalar_lea.sflag [#allocation5], %s162
        %s164 = sand.u32 %s40, 1
        %s165 = smul.addr %s164, 64
        %s166 = scalar_lea.vmem [#allocation4], %s165
        // Predicated region
        $region29: #{tpu_custom_call.1} parent=27 // pred_check
          %p167 = pneg %p53
        $region30: #{tpu_custom_call.1} parent=27 // pred_check_branch
          %169 = sbr.rel (%p167) target = $region32
        $region31: #{tpu_custom_call.1} parent=27 // pred_region
          %170 = dma.done %s163, 1024
        $region32: #{tpu_custom_call.1} parent=27 // pred_fallthru
          _
        // Predicated region
        $region33: #{tpu_custom_call.1} parent=27 // pred_check
          %p171 = pneg %p74
        $region34: #{tpu_custom_call.1} parent=27 // pred_check_branch
          %173 = sbr.rel (%p171) target = $region36
        $region35: #{tpu_custom_call.1} parent=27 // pred_region
          %174 = dma.done [#allocation8], 1024
        $region36: #{tpu_custom_call.1} parent=27 // pred_fallthru
          _
        %s175 = sand.u32 %s40, 1
        %s176 = scalar_lea.sflag [#allocation5], %s175
        %s177 = sand.u32 %s40, 1
        %s178 = smul.addr %s177, 64
        %s179 = scalar_lea.vmem [#allocation4], %s178
        %p180 = pneg %p53
        %p181 = pneg %p50
        %p182 = pneg %p74
        %p183 = pneg %p71
        %p184 = pneg %p102
        %p185 = pneg %p99
        %s186 = sand.u32 %s89, 1
        %s187 = scalar_lea.sflag [#allocation6], %s186
        %s188 = sand.u32 %s89, 1
        %s189 = smul.addr %s188, 128
        %s190 = scalar_lea.vmem [#allocation9], %s189
        %p192 = scmp.eq.s32.totalorder %s25, 0
        // Predicated region
        $region37: #{tpu_custom_call.1} parent=27 // pred_check
          %p193 = pneg %p192
        $region38: #{tpu_custom_call.1} parent=27 // pred_check_branch
          %195 = sbr.rel (%p193) target = $region40
        $region39: #{tpu_custom_call.1} parent=27 // pred_region
          %v196 = vld [vmem:[%s166] sm:$0xf]
          %v197 = vld [vmem:[%s166 + $0x4] sm:$0xf]
          %v198 = vld [vmem:[%s166 + $0x8] sm:$0xf]
          %v199 = vld [vmem:[%s166 + $0xc] sm:$0xf]
          %v200 = vld [vmem:[%s166 + $0x10] sm:$0xf]
          %v201 = vld [vmem:[%s166 + $0x14] sm:$0xf]
          %v202 = vld [vmem:[%s166 + $0x18] sm:$0xf]
          %v203 = vld [vmem:[%s166 + $0x1c] sm:$0xf]
          %v204 = vld [vmem:[%s166 + $0x20] sm:$0xf]
          %v205 = vld [vmem:[%s166 + $0x24] sm:$0xf]
          %v206 = vld [vmem:[%s166 + $0x28] sm:$0xf]
          %v207 = vld [vmem:[%s166 + $0x2c] sm:$0xf]
          %v208 = vld [vmem:[%s166 + $0x30] sm:$0xf]
          %v209 = vld [vmem:[%s166 + $0x34] sm:$0xf]
          %v210 = vld [vmem:[%s166 + $0x38] sm:$0xf]
          %v211 = vld [vmem:[%s166 + $0x3c] sm:$0xf]
          %v212 = vld [vmem:[#allocation7] sm:$0xf]
          %v213 = vld [vmem:[#allocation7 + $0x4] sm:$0xf]
          %v214 = vld [vmem:[#allocation7 + $0x8] sm:$0xf]
          %v215 = vld [vmem:[#allocation7 + $0xc] sm:$0xf]
          %v216 = vld [vmem:[#allocation7 + $0x10] sm:$0xf]
          %v217 = vld [vmem:[#allocation7 + $0x14] sm:$0xf]
          %v218 = vld [vmem:[#allocation7 + $0x18] sm:$0xf]
          %v219 = vld [vmem:[#allocation7 + $0x1c] sm:$0xf]
          %v220 = vld [vmem:[#allocation7 + $0x20] sm:$0xf]
          %v221 = vld [vmem:[#allocation7 + $0x24] sm:$0xf]
          %v222 = vld [vmem:[#allocation7 + $0x28] sm:$0xf]
          %v223 = vld [vmem:[#allocation7 + $0x2c] sm:$0xf]
          %v224 = vld [vmem:[#allocation7 + $0x30] sm:$0xf]
          %v225 = vld [vmem:[#allocation7 + $0x34] sm:$0xf]
          %v226 = vld [vmem:[#allocation7 + $0x38] sm:$0xf]
          %v227 = vld [vmem:[#allocation7 + $0x3c] sm:$0xf]
          %v244 = vunpack.c.l.b16 %v196
          %v245 = vunpack.c.l.b16 %v197
          %v246 = vunpack.c.l.b16 %v198
          %v247 = vunpack.c.l.b16 %v199
          %v248 = vunpack.c.l.b16 %v200
          %v249 = vunpack.c.l.b16 %v201
          %v250 = vunpack.c.l.b16 %v202
          %v251 = vunpack.c.l.b16 %v203
          %v252 = vunpack.c.l.b16 %v204
          %v253 = vunpack.c.l.b16 %v205
          %v254 = vunpack.c.l.b16 %v206
          %v255 = vunpack.c.l.b16 %v207
          %v256 = vunpack.c.l.b16 %v208
          %v257 = vunpack.c.l.b16 %v209
          %v258 = vunpack.c.l.b16 %v210
          %v259 = vunpack.c.l.b16 %v211
          %v260 = vpack.c.b16 %v245, %v244
          %v261 = vpack.c.b16 %v247, %v246
          %v262 = vpack.c.b16 %v249, %v248
          %v263 = vpack.c.b16 %v251, %v250
          %v264 = vpack.c.b16 %v253, %v252
          %v265 = vpack.c.b16 %v255, %v254
          %v266 = vpack.c.b16 %v257, %v256
          %v267 = vpack.c.b16 %v259, %v258
          %v292 = vunpack.c.l.b16 %v212
          %v293 = vunpack.c.l.b16 %v213
          %v294 = vunpack.c.l.b16 %v214
          %v295 = vunpack.c.l.b16 %v215
          %v296 = vunpack.c.l.b16 %v216
          %v297 = vunpack.c.l.b16 %v217
          %v298 = vunpack.c.l.b16 %v218
          %v299 = vunpack.c.l.b16 %v219
          %v300 = vunpack.c.l.b16 %v220
          %v301 = vunpack.c.l.b16 %v221
          %v302 = vunpack.c.l.b16 %v222
          %v303 = vunpack.c.l.b16 %v223
          %v304 = vunpack.c.l.b16 %v224
          %v305 = vunpack.c.l.b16 %v225
          %v306 = vunpack.c.l.b16 %v226
          %v307 = vunpack.c.l.b16 %v227
          %v308 = vpack.c.b16 %v293, %v292
          %v309 = vpack.c.b16 %v295, %v294
          %v310 = vpack.c.b16 %v297, %v296
          %v311 = vpack.c.b16 %v299, %v298
          %v312 = vpack.c.b16 %v301, %v300
          %v313 = vpack.c.b16 %v303, %v302
          %v314 = vpack.c.b16 %v305, %v304
          %v315 = vpack.c.b16 %v307, %v306
          %324 = vmatprep.subr.bf16.mxu0 0
          %325 = vmatpush1.bf16.msra.mxu0 %v308
          %326 = vmatprep.subr.bf16.mxu0 0
          %327 = vmatpush1.bf16.msra.mxu0 %v309
          %328 = vmatprep.subr.bf16.mxu0 0
          %329 = vmatpush1.bf16.msra.mxu0 %v310
          %330 = vmatprep.subr.bf16.mxu0 0
          %331 = vmatpush1.bf16.msra.mxu0 %v311
          %332 = vmatprep.subr.bf16.mxu0 0
          %333 = vmatpush1.bf16.msra.mxu0 %v312
          %334 = vmatprep.subr.bf16.mxu0 0
          %335 = vmatpush1.bf16.msra.mxu0 %v313
          %336 = vmatprep.subr.bf16.mxu0 0
          %337 = vmatpush1.bf16.msra.mxu0 %v314
          %338 = vmatprep.subr.bf16.mxu0 0
          %339 = vmatpush1.bf16.msra.mxu0 %v315
          %340 = vmatprep.subr.bf16.mxu0 0
          %341 = vmatpush1.bf16.msra.mxu0 0
          %342 = vmatprep.subr.bf16.mxu0 0
          %343 = vmatpush1.bf16.msra.mxu0 0
          %344 = vmatprep.subr.bf16.mxu0 0
          %345 = vmatpush1.bf16.msra.mxu0 0
          %346 = vmatprep.subr.bf16.mxu0 0
          %347 = vmatpush1.bf16.msra.mxu0 0
          %348 = vmatprep.subr.bf16.mxu0 0
          %349 = vmatpush1.bf16.msra.mxu0 0
          %350 = vmatprep.subr.bf16.mxu0 0
          %351 = vmatpush1.bf16.msra.mxu0 0
          %352 = vmatprep.subr.bf16.mxu0 0
          %353 = vmatpush1.bf16.msra.mxu0 0
          %354 = vmatprep.subr.bf16.mxu0 0
          %355 = vmatpush1.bf16.msra.mxu0 0
          %356 = vmatprep.mubr.bf16.mxu0 0
          %357 = vmatmul.mubr.bf16.gmra.mrb[0].mxu0 %v260
          %v358 = vpop.f32.mrb[0].mxu0
          %v359 = vadd.f32 0.0, %v358
          %v360 = vpop.f32.mrb[0].mxu0
          %v361 = vpop.f32.mrb[0].mxu0
          %v362 = vadd.f32 0.0, %v361
          %v363 = vpop.f32.mrb[0].mxu0
          %364 = vmatprep.mubr.bf16.mxu0 0
          %365 = vmatmul.mubr.bf16.gmra.mrb[0].mxu0 %v261
          %v366 = vpop.f32.mrb[0].mxu0
          %v367 = vadd.f32 0.0, %v366
          %v368 = vpop.f32.mrb[0].mxu0
          %v369 = vpop.f32.mrb[0].mxu0
          %v370 = vadd.f32 0.0, %v369
          %v371 = vpop.f32.mrb[0].mxu0
          %372 = vmatprep.mubr.bf16.mxu0 0
          %373 = vmatmul.mubr.bf16.gmra.mrb[0].mxu0 %v262
          %v374 = vpop.f32.mrb[0].mxu0
          %v375 = vadd.f32 0.0, %v374
          %v376 = vpop.f32.mrb[0].mxu0
          %v377 = vpop.f32.mrb[0].mxu0
          %v378 = vadd.f32 0.0, %v377
          %v379 = vpop.f32.mrb[0].mxu0
          %380 = vmatprep.mubr.bf16.mxu0 0
          %381 = vmatmul.mubr.bf16.gmra.mrb[0].mxu0 %v263
          %v382 = vpop.f32.mrb[0].mxu0
          %v383 = vadd.f32 0.0, %v382
          %v384 = vpop.f32.mrb[0].mxu0
          %v385 = vpop.f32.mrb[0].mxu0
          %v386 = vadd.f32 0.0, %v385
          %v387 = vpop.f32.mrb[0].mxu0
          %388 = vmatprep.mubr.bf16.mxu0 0
          %389 = vmatmul.mubr.bf16.gmra.mrb[0].mxu0 %v264
          %v390 = vpop.f32.mrb[0].mxu0
          %v391 = vadd.f32 0.0, %v390
          %v392 = vpop.f32.mrb[0].mxu0
          %v393 = vpop.f32.mrb[0].mxu0
          %v394 = vadd.f32 0.0, %v393
          %v395 = vpop.f32.mrb[0].mxu0
          %396 = vmatprep.mubr.bf16.mxu0 0
          %397 = vmatmul.mubr.bf16.gmra.mrb[0].mxu0 %v265
          %v398 = vpop.f32.mrb[0].mxu0
          %v399 = vadd.f32 0.0, %v398
          %v400 = vpop.f32.mrb[0].mxu0
          %v401 = vpop.f32.mrb[0].mxu0
          %v402 = vadd.f32 0.0, %v401
          %v403 = vpop.f32.mrb[0].mxu0
          %404 = vmatprep.mubr.bf16.mxu0 0
          %405 = vmatmul.mubr.bf16.gmra.mrb[0].mxu0 %v266
          %v406 = vpop.f32.mrb[0].mxu0
          %v407 = vadd.f32 0.0, %v406
          %v408 = vpop.f32.mrb[0].mxu0
          %v409 = vpop.f32.mrb[0].mxu0
          %v410 = vadd.f32 0.0, %v409
          %v411 = vpop.f32.mrb[0].mxu0
          %412 = vmatprep.mubr.bf16.mxu0 0
          %413 = vmatmul.mubr.bf16.gmra.mrb[0].mxu0 %v267
          %v414 = vpop.f32.mrb[0].mxu0
          %v415 = vadd.f32 0.0, %v414
          %v416 = vpop.f32.mrb[0].mxu0
          %v417 = vpop.f32.mrb[0].mxu0
          %v418 = vadd.f32 0.0, %v417
          %v419 = vpop.f32.mrb[0].mxu0
          %420 = vdwg.mxu0
          %v421 = vunpack.c.l.bf16 %v196
          %v422 = vunpack.c.l.bf16 %v197
          %v423 = vunpack.c.l.bf16 %v198
          %v424 = vunpack.c.l.bf16 %v199
          %v425 = vunpack.c.l.bf16 %v200
          %v426 = vunpack.c.l.bf16 %v201
          %v427 = vunpack.c.l.bf16 %v202
          %v428 = vunpack.c.l.bf16 %v203
          %v429 = vunpack.c.l.bf16 %v204
          %v430 = vunpack.c.l.bf16 %v205
          %v431 = vunpack.c.l.bf16 %v206
          %v432 = vunpack.c.l.bf16 %v207
          %v433 = vunpack.c.l.bf16 %v208
          %v434 = vunpack.c.l.bf16 %v209
          %v435 = vunpack.c.l.bf16 %v210
          %v436 = vunpack.c.l.bf16 %v211
          %v437 = vmul.f32 %v359, %v421
          %v438 = vmul.f32 %v362, %v422
          %v439 = vmul.f32 %v367, %v423
          %v440 = vmul.f32 %v370, %v424
          %v441 = vmul.f32 %v375, %v425
          %v442 = vmul.f32 %v378, %v426
          %v443 = vmul.f32 %v383, %v427
          %v444 = vmul.f32 %v386, %v428
          %v445 = vmul.f32 %v391, %v429
          %v446 = vmul.f32 %v394, %v430
          %v447 = vmul.f32 %v399, %v431
          %v448 = vmul.f32 %v402, %v432
          %v449 = vmul.f32 %v407, %v433
          %v450 = vmul.f32 %v410, %v434
          %v451 = vmul.f32 %v415, %v435
          %v452 = vmul.f32 %v418, %v436
          %453 = vadd.xlane.f32.xlu0 %v437
          %v454 = vpop.xlane.xlu0 %453
          %455 = vadd.xlane.f32.xlu0 %v438
          %v456 = vpop.xlane.xlu0 %455
          %457 = vadd.xlane.f32.xlu0 %v439
          %v458 = vpop.xlane.xlu0 %457
          %459 = vadd.xlane.f32.xlu0 %v440
          %v460 = vpop.xlane.xlu0 %459
          %461 = vadd.xlane.f32.xlu0 %v441
          %v462 = vpop.xlane.xlu0 %461
          %463 = vadd.xlane.f32.xlu0 %v442
          %v464 = vpop.xlane.xlu0 %463
          %465 = vadd.xlane.f32.xlu0 %v443
          %v466 = vpop.xlane.xlu0 %465
          %467 = vadd.xlane.f32.xlu0 %v444
          %v468 = vpop.xlane.xlu0 %467
          %469 = vadd.xlane.f32.xlu0 %v445
          %v470 = vpop.xlane.xlu0 %469
          %471 = vadd.xlane.f32.xlu0 %v446
          %v472 = vpop.xlane.xlu0 %471
          %473 = vadd.xlane.f32.xlu0 %v447
          %v474 = vpop.xlane.xlu0 %473
          %475 = vadd.xlane.f32.xlu0 %v448
          %v476 = vpop.xlane.xlu0 %475
          %477 = vadd.xlane.f32.xlu0 %v449
          %v478 = vpop.xlane.xlu0 %477
          %479 = vadd.xlane.f32.xlu0 %v450
          %v480 = vpop.xlane.xlu0 %479
          %481 = vadd.xlane.f32.xlu0 %v451
          %v482 = vpop.xlane.xlu0 %481
          %483 = vadd.xlane.f32.xlu0 %v452
          %v484 = vpop.xlane.xlu0 %483
          %v485 = vmul.f32 %v454, 0.5
          %v486 = vmul.f32 %v456, 0.5
          %v487 = vmul.f32 %v458, 0.5
          %v488 = vmul.f32 %v460, 0.5
          %v489 = vmul.f32 %v462, 0.5
          %v490 = vmul.f32 %v464, 0.5
          %v491 = vmul.f32 %v466, 0.5
          %v492 = vmul.f32 %v468, 0.5
          %v493 = vmul.f32 %v470, 0.5
          %v494 = vmul.f32 %v472, 0.5
          %v495 = vmul.f32 %v474, 0.5
          %v496 = vmul.f32 %v476, 0.5
          %v497 = vmul.f32 %v478, 0.5
          %v498 = vmul.f32 %v480, 0.5
          %v499 = vmul.f32 %v482, 0.5
          %v500 = vmul.f32 %v484, 0.5
          %vm501 = vcmask 7168
          %502 = vst.msk [vmem:[#allocation3] sm:$0xff] %vm501, %v485
          %503 = vst.msk [vmem:[#allocation3 + $0x8] sm:$0xff] %vm501, %v486
          %504 = vst.msk [vmem:[#allocation3 + $0x10] sm:$0xff] %vm501, %v487
          %505 = vst.msk [vmem:[#allocation3 + $0x18] sm:$0xff] %vm501, %v488
          %506 = vst.msk [vmem:[#allocation3 + $0x20] sm:$0xff] %vm501, %v489
          %507 = vst.msk [vmem:[#allocation3 + $0x28] sm:$0xff] %vm501, %v490
          %508 = vst.msk [vmem:[#allocation3 + $0x30] sm:$0xff] %vm501, %v491
          %509 = vst.msk [vmem:[#allocation3 + $0x38] sm:$0xff] %vm501, %v492
          %510 = vst.msk [vmem:[#allocation3 + $0x40] sm:$0xff] %vm501, %v493
          %511 = vst.msk [vmem:[#allocation3 + $0x48] sm:$0xff] %vm501, %v494
          %512 = vst.msk [vmem:[#allocation3 + $0x50] sm:$0xff] %vm501, %v495
          %513 = vst.msk [vmem:[#allocation3 + $0x58] sm:$0xff] %vm501, %v496
          %514 = vst.msk [vmem:[#allocation3 + $0x60] sm:$0xff] %vm501, %v497
          %515 = vst.msk [vmem:[#allocation3 + $0x68] sm:$0xff] %vm501, %v498
          %516 = vst.msk [vmem:[#allocation3 + $0x70] sm:$0xff] %vm501, %v499
          %517 = vst.msk [vmem:[#allocation3 + $0x78] sm:$0xff] %vm501, %v500
          %v518 = vpack.c.bf16 %v362, %v359
          %v519 = vpack.c.bf16 %v370, %v367
          %v520 = vpack.c.bf16 %v378, %v375
          %v521 = vpack.c.bf16 %v386, %v383
          %v522 = vpack.c.bf16 %v394, %v391
          %v523 = vpack.c.bf16 %v402, %v399
          %v524 = vpack.c.bf16 %v410, %v407
          %v525 = vpack.c.bf16 %v418, %v415
          %526 = vst [vmem:[#allocation2] sm:$0xff] %v518
          %527 = vst [vmem:[#allocation2 + $0x8] sm:$0xff] %v519
          %528 = vst [vmem:[#allocation2 + $0x10] sm:$0xff] %v520
          %529 = vst [vmem:[#allocation2 + $0x18] sm:$0xff] %v521
          %530 = vst [vmem:[#allocation2 + $0x20] sm:$0xff] %v522
          %531 = vst [vmem:[#allocation2 + $0x28] sm:$0xff] %v523
          %532 = vst [vmem:[#allocation2 + $0x30] sm:$0xff] %v524
          %533 = vst [vmem:[#allocation2 + $0x38] sm:$0xff] %v525
        $region40: #{tpu_custom_call.1} parent=27 // pred_fallthru
          _
        %s534 = smul.u32 %s25, 128
        %s535 = sshra.s32 %s534, 3
        %s536 = sand.u32 %s534, 7
        %s537 = smul.addr %s535, 4
        %s538 = scalar_lea.vmem %s166, %s537 [#allocation4]
        %v539 = vld [vmem:[%s538] sm:$0xf]
        %v540 = vld [vmem:[%s538 + $0x4] sm:$0xf]
        %v541 = vld [vmem:[%s538 + $0x8] sm:$0xf]
        %v542 = vld [vmem:[%s538 + $0xc] sm:$0xf]
        %v543 = vld [vmem:[%s538 + $0x10] sm:$0xf]
        %v544 = vld [vmem:[%s538 + $0x14] sm:$0xf]
        %v545 = vld [vmem:[%s538 + $0x18] sm:$0xf]
        %v546 = vld [vmem:[%s538 + $0x1c] sm:$0xf]
        %v547 = vld [vmem:[%s538 + $0x20] sm:$0xf]
        %v548 = vld [vmem:[%s538 + $0x24] sm:$0xf]
        %v549 = vld [vmem:[%s538 + $0x28] sm:$0xf]
        %v550 = vld [vmem:[%s538 + $0x2c] sm:$0xf]
        %v551 = vld [vmem:[%s538 + $0x30] sm:$0xf]
        %v552 = vld [vmem:[%s538 + $0x34] sm:$0xf]
        %v553 = vld [vmem:[%s538 + $0x38] sm:$0xf]
        %v554 = vld [vmem:[%s538 + $0x3c] sm:$0xf]
        %v555 = vld [vmem:[#allocation2] sm:$0xff]
        %v556 = vld [vmem:[#allocation2 + $0x8] sm:$0xff]
        %v557 = vld [vmem:[#allocation2 + $0x10] sm:$0xff]
        %v558 = vld [vmem:[#allocation2 + $0x18] sm:$0xff]
        %v559 = vld [vmem:[#allocation2 + $0x20] sm:$0xff]
        %v560 = vld [vmem:[#allocation2 + $0x28] sm:$0xff]
        %v561 = vld [vmem:[#allocation2 + $0x30] sm:$0xff]
        %v562 = vld [vmem:[#allocation2 + $0x38] sm:$0xff]
        %v579 = vunpack.c.l.b16 %v539
        %v580 = vunpack.c.l.b16 %v540
        %v581 = vunpack.c.l.b16 %v541
        %v582 = vunpack.c.l.b16 %v542
        %v583 = vunpack.c.l.b16 %v543
        %v584 = vunpack.c.l.b16 %v544
        %v585 = vunpack.c.l.b16 %v545
        %v586 = vunpack.c.l.b16 %v546
        %v587 = vunpack.c.l.b16 %v547
        %v588 = vunpack.c.l.b16 %v548
        %v589 = vunpack.c.l.b16 %v549
        %v590 = vunpack.c.l.b16 %v550
        %v591 = vunpack.c.l.b16 %v551
        %v592 = vunpack.c.l.b16 %v552
        %v593 = vunpack.c.l.b16 %v553
        %v594 = vunpack.c.l.b16 %v554
        %v595 = vpack.c.b16 %v580, %v579
        %v596 = vpack.c.b16 %v582, %v581
        %v597 = vpack.c.b16 %v584, %v583
        %v598 = vpack.c.b16 %v586, %v585
        %v599 = vpack.c.b16 %v588, %v587
        %v600 = vpack.c.b16 %v590, %v589
        %v601 = vpack.c.b16 %v592, %v591
        %v602 = vpack.c.b16 %v594, %v593
        %611 = vmatprep.subr.bf16.mxu0 0
        %612 = vmatpush1.bf16.xpose.msra.mxu0 %v595
        %613 = vmatprep.subr.bf16.mxu0 0
        %614 = vmatpush1.bf16.xpose.msra.mxu0 %v596
        %615 = vmatprep.subr.bf16.mxu0 0
        %616 = vmatpush1.bf16.xpose.msra.mxu0 %v597
        %617 = vmatprep.subr.bf16.mxu0 0
        %618 = vmatpush1.bf16.xpose.msra.mxu0 %v598
        %619 = vmatprep.subr.bf16.mxu0 0
        %620 = vmatpush1.bf16.xpose.msra.mxu0 %v599
        %621 = vmatprep.subr.bf16.mxu0 0
        %622 = vmatpush1.bf16.xpose.msra.mxu0 %v600
        %623 = vmatprep.subr.bf16.mxu0 0
        %624 = vmatpush1.bf16.xpose.msra.mxu0 %v601
        %625 = vmatprep.subr.bf16.mxu0 0
        %626 = vmatpush1.bf16.xpose.msra.mxu0 %v602
        %627 = vmatprep.subr.bf16.mxu0 0
        %628 = vmatpush1.bf16.xpose.msra.mxu0 0
        %629 = vmatprep.subr.bf16.mxu0 0
        %630 = vmatpush1.bf16.xpose.msra.mxu0 0
        %631 = vmatprep.subr.bf16.mxu0 0
        %632 = vmatpush1.bf16.xpose.msra.mxu0 0
        %633 = vmatprep.subr.bf16.mxu0 0
        %634 = vmatpush1.bf16.xpose.msra.mxu0 0
        %635 = vmatprep.subr.bf16.mxu0 0
        %636 = vmatpush1.bf16.xpose.msra.mxu0 0
        %637 = vmatprep.subr.bf16.mxu0 0
        %638 = vmatpush1.bf16.xpose.msra.mxu0 0
        %639 = vmatprep.subr.bf16.mxu0 0
        %640 = vmatpush1.bf16.xpose.msra.mxu0 0
        %641 = vmatprep.subr.bf16.mxu0 0
        %642 = vmatpush1.bf16.xpose.msra.mxu0 0
        %643 = vmatprep.mubr.bf16.mxu0 0
        %644 = vmatmul.mubr.bf16.gmra.mrb[0].mxu0 %v555
        %v645 = vpop.f32.mrb[0].mxu0
        %v646 = vadd.f32 0.0, %v645
        %v647 = vpop.f32.mrb[0].mxu0
        %v648 = vpop.f32.mrb[0].mxu0
        %v649 = vadd.f32 0.0, %v648
        %v650 = vpop.f32.mrb[0].mxu0
        %651 = vmatprep.mubr.bf16.mxu0 0
        %652 = vmatmul.mubr.bf16.gmra.mrb[0].mxu0 %v556
        %v653 = vpop.f32.mrb[0].mxu0
        %v654 = vadd.f32 0.0, %v653
        %v655 = vpop.f32.mrb[0].mxu0
        %v656 = vpop.f32.mrb[0].mxu0
        %v657 = vadd.f32 0.0, %v656
        %v658 = vpop.f32.mrb[0].mxu0
        %659 = vmatprep.mubr.bf16.mxu0 0
        %660 = vmatmul.mubr.bf16.gmra.mrb[0].mxu0 %v557
        %v661 = vpop.f32.mrb[0].mxu0
        %v662 = vadd.f32 0.0, %v661
        %v663 = vpop.f32.mrb[0].mxu0
        %v664 = vpop.f32.mrb[0].mxu0
        %v665 = vadd.f32 0.0, %v664
        %v666 = vpop.f32.mrb[0].mxu0
        %667 = vmatprep.mubr.bf16.mxu0 0
        %668 = vmatmul.mubr.bf16.gmra.mrb[0].mxu0 %v558
        %v669 = vpop.f32.mrb[0].mxu0
        %v670 = vadd.f32 0.0, %v669
        %v671 = vpop.f32.mrb[0].mxu0
        %v672 = vpop.f32.mrb[0].mxu0
        %v673 = vadd.f32 0.0, %v672
        %v674 = vpop.f32.mrb[0].mxu0
        %675 = vmatprep.mubr.bf16.mxu0 0
        %676 = vmatmul.mubr.bf16.gmra.mrb[0].mxu0 %v559
        %v677 = vpop.f32.mrb[0].mxu0
        %v678 = vadd.f32 0.0, %v677
        %v679 = vpop.f32.mrb[0].mxu0
        %v680 = vpop.f32.mrb[0].mxu0
        %v681 = vadd.f32 0.0, %v680
        %v682 = vpop.f32.mrb[0].mxu0
        %683 = vmatprep.mubr.bf16.mxu0 0
        %684 = vmatmul.mubr.bf16.gmra.mrb[0].mxu0 %v560
        %v685 = vpop.f32.mrb[0].mxu0
        %v686 = vadd.f32 0.0, %v685
        %v687 = vpop.f32.mrb[0].mxu0
        %v688 = vpop.f32.mrb[0].mxu0
        %v689 = vadd.f32 0.0, %v688
        %v690 = vpop.f32.mrb[0].mxu0
        %691 = vmatprep.mubr.bf16.mxu0 0
        %692 = vmatmul.mubr.bf16.gmra.mrb[0].mxu0 %v561
        %v693 = vpop.f32.mrb[0].mxu0
        %v694 = vadd.f32 0.0, %v693
        %v695 = vpop.f32.mrb[0].mxu0
        %v696 = vpop.f32.mrb[0].mxu0
        %v697 = vadd.f32 0.0, %v696
        %v698 = vpop.f32.mrb[0].mxu0
        %699 = vmatprep.mubr.bf16.mxu0 0
        %700 = vmatmul.mubr.bf16.gmra.mrb[0].mxu0 %v562
        %v701 = vpop.f32.mrb[0].mxu0
        %v702 = vadd.f32 0.0, %v701
        %v703 = vpop.f32.mrb[0].mxu0
        %v704 = vpop.f32.mrb[0].mxu0
        %v705 = vadd.f32 0.0, %v704
        %v706 = vpop.f32.mrb[0].mxu0
        %707 = vdwg.mxu0
        %v708 = vld [vmem:[#allocation3] sm:$0xff]
        %v709 = vld [vmem:[#allocation3 + $0x8] sm:$0xff]
        %v710 = vld [vmem:[#allocation3 + $0x10] sm:$0xff]
        %v711 = vld [vmem:[#allocation3 + $0x18] sm:$0xff]
        %v712 = vld [vmem:[#allocation3 + $0x20] sm:$0xff]
        %v713 = vld [vmem:[#allocation3 + $0x28] sm:$0xff]
        %v714 = vld [vmem:[#allocation3 + $0x30] sm:$0xff]
        %v715 = vld [vmem:[#allocation3 + $0x38] sm:$0xff]
        %v716 = vld [vmem:[#allocation3 + $0x40] sm:$0xff]
        %v717 = vld [vmem:[#allocation3 + $0x48] sm:$0xff]
        %v718 = vld [vmem:[#allocation3 + $0x50] sm:$0xff]
        %v719 = vld [vmem:[#allocation3 + $0x58] sm:$0xff]
        %v720 = vld [vmem:[#allocation3 + $0x60] sm:$0xff]
        %v721 = vld [vmem:[#allocation3 + $0x68] sm:$0xff]
        %v722 = vld [vmem:[#allocation3 + $0x70] sm:$0xff]
        %v723 = vld [vmem:[#allocation3 + $0x78] sm:$0xff]
        %s724 = scalar_lea.vmem [#allocation3], %s534
        %v725 = vld [vmem:[%s724] sm:$0xff]
        %v726 = vld [vmem:[%s724 + $0x8] sm:$0xff]
        %v727 = vld [vmem:[%s724 + $0x10] sm:$0xff]
        %v728 = vld [vmem:[%s724 + $0x18] sm:$0xff]
        %v729 = vld [vmem:[%s724 + $0x20] sm:$0xff]
        %v730 = vld [vmem:[%s724 + $0x28] sm:$0xff]
        %v731 = vld [vmem:[%s724 + $0x30] sm:$0xff]
        %v732 = vld [vmem:[%s724 + $0x38] sm:$0xff]
        %v733 = vld [vmem:[%s724 + $0x40] sm:$0xff]
        %v734 = vld [vmem:[%s724 + $0x48] sm:$0xff]
        %v735 = vld [vmem:[%s724 + $0x50] sm:$0xff]
        %v736 = vld [vmem:[%s724 + $0x58] sm:$0xff]
        %v737 = vld [vmem:[%s724 + $0x60] sm:$0xff]
        %v738 = vld [vmem:[%s724 + $0x68] sm:$0xff]
        %v739 = vld [vmem:[%s724 + $0x70] sm:$0xff]
        %v740 = vld [vmem:[%s724 + $0x78] sm:$0xff]
        %741 = vxpose.xlu0.b32.start [1/16] %v725, 128
        %742 = vxpose.xlu0.b32.cont [2/16] %v726, 128
        %743 = vxpose.xlu0.b32.cont [3/16] %v727, 128
        %744 = vxpose.xlu0.b32.cont [4/16] %v728, 128
        %745 = vxpose.xlu0.b32.cont [5/16] %v729, 128
        %746 = vxpose.xlu0.b32.cont [6/16] %v730, 128
        %747 = vxpose.xlu0.b32.cont [7/16] %v731, 128
        %748 = vxpose.xlu0.b32.cont [8/16] %v732, 128
        %749 = vxpose.xlu0.b32.cont [9/16] %v733, 128
        %750 = vxpose.xlu0.b32.cont [10/16] %v734, 128
        %751 = vxpose.xlu0.b32.cont [11/16] %v735, 128
        %752 = vxpose.xlu0.b32.cont [12/16] %v736, 128
        %753 = vxpose.xlu0.b32.cont [13/16] %v737, 128
        %754 = vxpose.xlu0.b32.cont [14/16] %v738, 128
        %755 = vxpose.xlu0.b32.cont [15/16] %v739, 128
        %756 = vxpose.xlu0.b32.end [16/16] %v740, 128
        %v757 = vpop.trf.xlu0
        %v758 = vpop.trf.xlu0
        %v759 = vpop.trf.xlu0
        %v760 = vpop.trf.xlu0
        %v761 = vpop.trf.xlu0
        %v762 = vpop.trf.xlu0
        %v763 = vpop.trf.xlu0
        %v764 = vpop.trf.xlu0
        %v765 = vpop.trf.xlu0
        %v766 = vpop.trf.xlu0
        %v767 = vpop.trf.xlu0
        %v768 = vpop.trf.xlu0
        %v769 = vpop.trf.xlu0
        %v770 = vpop.trf.xlu0
        %v771 = vpop.trf.xlu0
        %v772 = vpop.trf.xlu0
        %774 = vset.pattern.permute.xlu0 0
        %775 = vperm.xlu0 %774, %v708
        %v776 = vpop.permute.xlu0 %775
        %779 = vset.pattern.permute.xlu0 0
        %780 = vperm.xlu0 %779, %v709
        %v781 = vpop.permute.xlu0 %780
        %784 = vset.pattern.permute.xlu0 0
        %785 = vperm.xlu0 %784, %v710
        %v786 = vpop.permute.xlu0 %785
        %789 = vset.pattern.permute.xlu0 0
        %790 = vperm.xlu0 %789, %v711
        %v791 = vpop.permute.xlu0 %790
        %794 = vset.pattern.permute.xlu0 0
        %795 = vperm.xlu0 %794, %v712
        %v796 = vpop.permute.xlu0 %795
        %799 = vset.pattern.permute.xlu0 0
        %800 = vperm.xlu0 %799, %v713
        %v801 = vpop.permute.xlu0 %800
        %804 = vset.pattern.permute.xlu0 0
        %805 = vperm.xlu0 %804, %v714
        %v806 = vpop.permute.xlu0 %805
        %809 = vset.pattern.permute.xlu0 0
        %810 = vperm.xlu0 %809, %v715
        %v811 = vpop.permute.xlu0 %810
        %814 = vset.pattern.permute.xlu0 0
        %815 = vperm.xlu0 %814, %v716
        %v816 = vpop.permute.xlu0 %815
        %819 = vset.pattern.permute.xlu0 0
        %820 = vperm.xlu0 %819, %v717
        %v821 = vpop.permute.xlu0 %820
        %824 = vset.pattern.permute.xlu0 0
        %825 = vperm.xlu0 %824, %v718
        %v826 = vpop.permute.xlu0 %825
        %829 = vset.pattern.permute.xlu0 0
        %830 = vperm.xlu0 %829, %v719
        %v831 = vpop.permute.xlu0 %830
        %834 = vset.pattern.permute.xlu0 0
        %835 = vperm.xlu0 %834, %v720
        %v836 = vpop.permute.xlu0 %835
        %839 = vset.pattern.permute.xlu0 0
        %840 = vperm.xlu0 %839, %v721
        %v841 = vpop.permute.xlu0 %840
        %844 = vset.pattern.permute.xlu0 0
        %845 = vperm.xlu0 %844, %v722
        %v846 = vpop.permute.xlu0 %845
        %849 = vset.pattern.permute.xlu0 0
        %850 = vperm.xlu0 %849, %v723
        %v851 = vpop.permute.xlu0 %850
        %v853 = vlaneseq
        %v854 = vshrl.u32 %v853, 7
        %v855 = vsub.s32 0, %v854
        %v856 = vrot.slane %v757, %v855
        %v857 = vadd.f32 %v776, %v856
        %v858 = vadd.f32 %v781, %v856
        %v859 = vadd.f32 %v786, %v856
        %v860 = vadd.f32 %v791, %v856
        %v861 = vadd.f32 %v796, %v856
        %v862 = vadd.f32 %v801, %v856
        %v863 = vadd.f32 %v806, %v856
        %v864 = vadd.f32 %v811, %v856
        %v865 = vadd.f32 %v816, %v856
        %v866 = vadd.f32 %v821, %v856
        %v867 = vadd.f32 %v826, %v856
        %v868 = vadd.f32 %v831, %v856
        %v869 = vadd.f32 %v836, %v856
        %v870 = vadd.f32 %v841, %v856
        %v871 = vadd.f32 %v846, %v856
        %v872 = vadd.f32 %v851, %v856
        %v873 = vsub.f32 %v857, %v646
        %v874 = vsub.f32 %v858, %v649
        %v875 = vsub.f32 %v859, %v654
        %v876 = vsub.f32 %v860, %v657
        %v877 = vsub.f32 %v861, %v662
        %v878 = vsub.f32 %v862, %v665
        %v879 = vsub.f32 %v863, %v670
        %v880 = vsub.f32 %v864, %v673
        %v881 = vsub.f32 %v865, %v678
        %v882 = vsub.f32 %v866, %v681
        %v883 = vsub.f32 %v867, %v686
        %v884 = vsub.f32 %v868, %v689
        %v885 = vsub.f32 %v869, %v694
        %v886 = vsub.f32 %v870, %v697
        %v887 = vsub.f32 %v871, %v702
        %v888 = vsub.f32 %v872, %v705
        %889 = vst [vmem:[%s190] sm:$0xff] %v873
        %890 = vst [vmem:[%s190 + $0x8] sm:$0xff] %v874
        %891 = vst [vmem:[%s190 + $0x10] sm:$0xff] %v875
        %892 = vst [vmem:[%s190 + $0x18] sm:$0xff] %v876
        %893 = vst [vmem:[%s190 + $0x20] sm:$0xff] %v877
        %894 = vst [vmem:[%s190 + $0x28] sm:$0xff] %v878
        %895 = vst [vmem:[%s190 + $0x30] sm:$0xff] %v879
        %896 = vst [vmem:[%s190 + $0x38] sm:$0xff] %v880
        %897 = vst [vmem:[%s190 + $0x40] sm:$0xff] %v881
        %898 = vst [vmem:[%s190 + $0x48] sm:$0xff] %v882
        %899 = vst [vmem:[%s190 + $0x50] sm:$0xff] %v883
        %900 = vst [vmem:[%s190 + $0x58] sm:$0xff] %v884
        %901 = vst [vmem:[%s190 + $0x60] sm:$0xff] %v885
        %902 = vst [vmem:[%s190 + $0x68] sm:$0xff] %v886
        %903 = vst [vmem:[%s190 + $0x70] sm:$0xff] %v887
        %904 = vst [vmem:[%s190 + $0x78] sm:$0xff] %v888
        %s905 = sand.u32 %s89, 1
        %s906 = scalar_lea.sflag [#allocation6], %s905
        %s907 = sand.u32 %s89, 1
        %s908 = smul.addr %s907, 128
        %s909 = scalar_lea.vmem [#allocation9], %s908
        // Predicated region
        $region41: #{tpu_custom_call.1} parent=27 // pred_check
          %p910 = pneg %p99
        $region42: #{tpu_custom_call.1} parent=27 // pred_check_branch
          %912 = sbr.rel (%p910) target = $region44
        $region43: #{tpu_custom_call.1} parent=27 // pred_region
          %s914 = ssub.s32 2048, 2048
          %915 = vsyncadd %s906, %s914
          %s916 = smul.addr %s24, 16
          %s917 = sadd.s32 %s25, %s916
          %s918 = smul.addr %s917, 128
          %s919 = scalar_lea.hbm %s2, %s918
          %s920 = sshll.u32 %s909, 4
          %s921 = int_to_ptr.vmem [resolvable:$true] %s920
          %926 = dma.vmem_to_hbm [thread:$0]  %s921, 2048, %s919, %s906, 128, 128, 8
        $region44: #{tpu_custom_call.1} parent=27 // pred_fallthru
          _
      $region28: #{tpu_custom_call.1} parent=5 // pred_fallthru
        _
      %p927 = scmp.le.s32.totalorder 2, %s15
      // Predicated region
      $region45: #{tpu_custom_call.1} parent=5 // pred_check
        %p928 = pneg %p927
      $region46: #{tpu_custom_call.1} parent=5 // pred_check_branch
        %930 = sbr.rel (%p928) target = $region48
      $region47: #{tpu_custom_call.1} parent=5 // pred_region
        %s931 = ssub.s32 %s15, 2
        // Predicated region
        $region49: #{tpu_custom_call.1} parent=47 // pred_check
          %p932 = pneg %p105
        $region50: #{tpu_custom_call.1} parent=47 // pred_check_branch
          %934 = sbr.rel (%p932) target = $region52
        $region51: #{tpu_custom_call.1} parent=47 // pred_region
          %s935 = sand.u32 %s90, 1
          %s936 = scalar_lea.sflag [#allocation6], %s935
          %s937 = sand.u32 %s90, 1
          %s938 = smul.addr %s937, 128
          %s939 = scalar_lea.vmem [#allocation9], %s938
          %940 = dma.done %s936, 2048
        $region52: #{tpu_custom_call.1} parent=47 // pred_fallthru
          _
      $region48: #{tpu_custom_call.1} parent=5 // pred_fallthru
        _
    $region6: #{tpu_custom_call.1} parent=1 // loop_footer
      %s19 = sadd.s32 1, %s15
    $region7: #{tpu_custom_call.1} parent=1 // loop_footer_branch
      %14 = sbr.rel target = $region3
    $region8: #{tpu_custom_call.1} parent=1 // loop_exit
      _
    %941 = vsyncpa [#allocation5], 1
    %s942 = scalar_lea.sflag [#allocation5], 1
    %943 = vsyncpa %s942, 1
    %944 = vsyncpa [#allocation8], 1
    %945 = vsyncpa [#allocation6], 1
    %s946 = scalar_lea.sflag [#allocation6], 1
    %947 = vsyncpa %s946, 1

</llo_original>
